<compile_context>
chip_gen: v7x
topology: tpu7x:2x2x1
jax: 0.10.0
libtpu: 0.0.40
codegen_flags: <defaults>
</compile_context>

<pallas_src>
import functools

import jax
import jax.numpy as jnp
from jax.experimental import pallas as pl
from jax.experimental.pallas import tpu as pltpu

FEAT = 768          # ConvNeXt-T final feature width
HIDDEN = 512
NUM_CLASSES = 2
PATCH = 4
LN_EPS = 1e-6

K_IN = PATCH * PATCH * 3   # 48 patchify-conv input features (NOT padded to 128)
NOUT_PAD = 128             # classifier outputs 2 -> 128 (lane-dense store)


def _fused_kernel(p_ref, we_ref, be_ref, cc_ref, g_ref, bta_ref,
                  w1a_ref, w1b_ref, b1_ref, w2_ref, b2_ref,
                  o_ref, acc_ref, *, inv_np):
    """Grid = (batch_blocks [parallel], patch_tiles [arbitrary])."""
    pi = pl.program_id(1)

    @pl.when(pi == 0)
    def _init():
        acc_ref[...] = jnp.zeros_like(acc_ref)

    # --- streaming phase: accumulate per-sample patch sums (GAP numerator). ---
    # p_ref block is (tile_np, b_tile, 48) bf16; reduce over the leading (patch)
    # axis = pure vreg adds with f32 accumulation.  Zero-padded patches/samples
    # contribute nothing.
    acc_ref[...] += jnp.sum(p_ref[...].astype(jnp.float32), axis=0)

    # --- finalize phase: stem matmul after pooling, LayerNorm, FC head. -------
    @pl.when(pi == pl.num_programs(1) - 1)
    def _finalize():
        # GAP commuted past the linear patchify conv; conv bias hoisted past the
        # mean (mean weights sum to 1).
        # TODO(synk): revert to per-tile matmul + feature accumulation if a real
        # (nonlinear) ConvNeXt base model replaces this linear stand-in.
        p_mean = acc_ref[...] * inv_np                                   # (bt, 48) f32
        feat = jnp.dot(p_mean.astype(jnp.bfloat16), we_ref[...],
                       preferred_element_type=jnp.float32) + be_ref[...]  # (bt, 768)

        # replaced classifier: LayerNorm([768,1,1], eps=1e-6, affine) + Flatten
        mu = jnp.mean(feat, axis=-1, keepdims=True)
        var = jnp.mean((feat - mu) ** 2, axis=-1, keepdims=True)
        xln = (feat - mu) * jax.lax.rsqrt(var + LN_EPS) * g_ref[...] + bta_ref[...]

        # fc head: cat((x, cell_count), 1) @ W1 + b1 == x @ W1a + cc * w1b + b1
        h = jnp.dot(xln.astype(jnp.bfloat16), w1a_ref[...],
                    preferred_element_type=jnp.float32)
        h = h + cc_ref[...] * w1b_ref[...] + b1_ref[...]
        h = jnp.maximum(h, 0.0)                                          # ReLU
        # Dropout(0.5): inference-mode identity.
        # TODO(synk): training-mode dropout (pltpu.prng_random_bits mask) not emitted.
        o_ref[...] = jnp.dot(h.astype(jnp.bfloat16), w2_ref[...],
                             preferred_element_type=jnp.float32) + b2_ref[...]


def init_params(key, num_classes=NUM_CLASSES):
    ks = jax.random.split(key, 6)

    def uni(k, shape, fan_in):
        bound = 1.0 / jnp.sqrt(jnp.float32(fan_in))
        return jax.random.uniform(k, shape, jnp.float32, -bound, bound)

    w_embed = uni(ks[0], (K_IN, FEAT), K_IN).astype(jnp.bfloat16)   # stem conv as matmul
    w1 = uni(ks[2], (FEAT + 1, HIDDEN), FEAT + 1)                   # Linear(769, 512), transposed
    w2 = uni(ks[4], (HIDDEN, num_classes), HIDDEN)                  # Linear(512, num_classes)
    w2 = jnp.pad(w2, ((0, 0), (0, NOUT_PAD - num_classes))).astype(jnp.bfloat16)
    b2 = jnp.pad(uni(ks[5], (1, num_classes), HIDDEN),
                 ((0, 0), (0, NOUT_PAD - num_classes)))

    return dict(
        w_embed=w_embed,                                            # (48, 768) bf16
        b_embed=uni(ks[1], (1, FEAT), K_IN),                        # (1, 768) f32
        ln_gamma=jnp.ones((1, FEAT), jnp.float32),                  # LayerNorm([768,1,1]) affine
        ln_beta=jnp.zeros((1, FEAT), jnp.float32),
        w1a=w1[:FEAT, :].astype(jnp.bfloat16),                      # rows acting on image features
        w1b=w1[FEAT:FEAT + 1, :],                                   # row acting on cell_count (f32)
        b1=uni(ks[3], (1, HIDDEN), FEAT + 1),
        w2=w2,                                                      # (512, 128) bf16, zero-padded cols
        b2=b2,                                                      # (1, 128) f32, zero-padded cols
    )


def convnext_with_cellcount_forward(x_nchw, cell_count, params, *,
                                    tile_np=None, b_tile=None):
    B, C, H, W = x_nchw.shape
    assert H % PATCH == 0 and W % PATCH == 0, "spatial dims must be multiples of 4"
    Hp, Wp = H // PATCH, W // PATCH
    Np = Hp * Wp
    K = PATCH * PATCH * C
    assert K == K_IN, "synthetic stem expects 3-channel input"

    b_pad8 = ((B + 7) // 8) * 8
    if b_tile is None:
        b_tile = min(32, b_pad8)                 # sublane-aligned batch block
    b_pad = ((b_pad8 + b_tile - 1) // b_tile) * b_tile
    if tile_np is None:
        tile_np = min(512, Np)                   # big tiles amortize per-step overhead
    np_pad = ((Np + tile_np - 1) // tile_np) * tile_np

    # NCHW -> im2col, patch-major layout (Np, B, 48); pad patch/batch axes only
    # (K stays 48 -> no dead lanes DMA'd).
    x_nhwc = jnp.transpose(x_nchw, (0, 2, 3, 1))
    patches = x_nhwc.reshape(B, Hp, PATCH, Wp, PATCH, C)
    patches = jnp.transpose(patches, (1, 3, 0, 2, 4, 5)).reshape(Np, B, K)
    patches = jnp.pad(patches, ((0, np_pad - Np), (0, b_pad - B), (0, 0)))
    patches = patches.astype(jnp.bfloat16)

    cc = jnp.pad(cell_count.reshape(B, 1).astype(jnp.float32),
                 ((0, b_pad - B), (0, 0)))       # == unsqueeze(1), sublane-padded

    args = (patches, params["w_embed"], params["b_embed"], cc,
            params["ln_gamma"], params["ln_beta"],
            params["w1a"], params["w1b"], params["b1"],
            params["w2"], params["b2"])

    grid = (b_pad // b_tile, np_pad // tile_np)
    in_specs = [
        pl.BlockSpec((tile_np, b_tile, K_IN), lambda bi, pi: (pi, bi, 0)),   # patches
        pl.BlockSpec((K_IN, FEAT),            lambda bi, pi: (0, 0)),        # w_embed
        pl.BlockSpec((1, FEAT),               lambda bi, pi: (0, 0)),        # b_embed
        pl.BlockSpec((b_tile, 1),             lambda bi, pi: (bi, 0)),       # cell_count
        pl.BlockSpec((1, FEAT),               lambda bi, pi: (0, 0)),        # ln_gamma
        pl.BlockSpec((1, FEAT),               lambda bi, pi: (0, 0)),        # ln_beta
        pl.BlockSpec((FEAT, HIDDEN),          lambda bi, pi: (0, 0)),        # w1a
        pl.BlockSpec((1, HIDDEN),             lambda bi, pi: (0, 0)),        # w1b
        pl.BlockSpec((1, HIDDEN),             lambda bi, pi: (0, 0)),        # b1
        pl.BlockSpec((HIDDEN, NOUT_PAD),      lambda bi, pi: (0, 0)),        # w2
        pl.BlockSpec((1, NOUT_PAD),           lambda bi, pi: (0, 0)),        # b2
    ]
    out_spec = pl.BlockSpec((b_tile, NOUT_PAD), lambda bi, pi: (bi, 0))      # resident over pi

    out = pl.pallas_call(
        functools.partial(_fused_kernel, inv_np=1.0 / float(Np)),
        out_shape=jax.ShapeDtypeStruct((b_pad, NOUT_PAD), jnp.float32),
        grid_spec=pltpu.PrefetchScalarGridSpec(
            num_scalar_prefetch=0,
            grid=grid,
            in_specs=in_specs,
            out_specs=out_spec,
            scratch_shapes=[pltpu.VMEM((b_tile, K_IN), jnp.float32)],
        ),
        compiler_params=pltpu.CompilerParams(
            dimension_semantics=("parallel", "arbitrary"),
            vmem_limit_bytes=32 * 1024 * 1024,
        ),
    )(*args)

    return out[:B, :NUM_CLASSES]


if __name__ == "__main__":
    key = jax.random.PRNGKey(0)
    k_param, k_x, k_cc = jax.random.split(key, 3)

    params = init_params(k_param)

    B, C, H, W = 2, 3, 16, 16
    x = jax.random.normal(k_x, (B, C, H, W), dtype=jnp.float32)          # NCHW like PyTorch
    cell_count = jax.random.uniform(k_cc, (B,), jnp.float32, 0.0, 100.0)

    # tile_np=8 forces a 2-step patch grid so the accumulator path is exercised.
    fwd = jax.jit(functools.partial(convnext_with_cellcount_forward, tile_np=8))
    out = jax.block_until_ready(fwd(x, cell_count, params))
    assert out.shape == (B, NUM_CLASSES)
    assert bool(jnp.all(jnp.isfinite(out)))
    print("KERNEL_OK")
</pallas_src>

<mosaic_0001>
module attributes {stable_mosaic.version = 11 : i64} {
  func.func @_fused_kernel(%arg0: i32, %arg1: i32, %arg2: memref<8x8x48xbf16, #tpu.memory_space<vmem>>, %arg3: memref<48x768xbf16, #tpu.memory_space<vmem>>, %arg4: memref<1x768xf32, #tpu.memory_space<vmem>>, %arg5: memref<8x1xf32, #tpu.memory_space<vmem>>, %arg6: memref<1x768xf32, #tpu.memory_space<vmem>>, %arg7: memref<1x768xf32, #tpu.memory_space<vmem>>, %arg8: memref<768x512xbf16, #tpu.memory_space<vmem>>, %arg9: memref<1x512xf32, #tpu.memory_space<vmem>>, %arg10: memref<1x512xf32, #tpu.memory_space<vmem>>, %arg11: memref<512x128xbf16, #tpu.memory_space<vmem>>, %arg12: memref<1x128xf32, #tpu.memory_space<vmem>>, %arg13: memref<8x128xf32, #tpu.memory_space<vmem>>, %arg14: memref<8x48xf32, #tpu.memory_space<vmem>>) attributes {dimension_semantics = [#tpu.dimension_semantics<parallel>, #tpu.dimension_semantics<arbitrary>], iteration_bounds = array<i64: 1, 2>, scalar_prefetch = 0 : i64, scratch_operands = 1 : i64, tpu.core_type = #tpu.core_type<tc>, window_params = [{transform_indices = @transform_0, window_bounds = array<i64: 8, 8, 48>}, {pipeline_mode = #tpu.pipeline_mode<synchronous>, transform_indices = @transform_1, window_bounds = array<i64: 48, 768>}, {pipeline_mode = #tpu.pipeline_mode<synchronous>, transform_indices = @transform_2, window_bounds = array<i64: 1, 768>}, {transform_indices = @transform_3, window_bounds = array<i64: 8, 1>}, {pipeline_mode = #tpu.pipeline_mode<synchronous>, transform_indices = @transform_4, window_bounds = array<i64: 1, 768>}, {pipeline_mode = #tpu.pipeline_mode<synchronous>, transform_indices = @transform_5, window_bounds = array<i64: 1, 768>}, {pipeline_mode = #tpu.pipeline_mode<synchronous>, transform_indices = @transform_6, window_bounds = array<i64: 768, 512>}, {pipeline_mode = #tpu.pipeline_mode<synchronous>, transform_indices = @transform_7, window_bounds = array<i64: 1, 512>}, {pipeline_mode = #tpu.pipeline_mode<synchronous>, transform_indices = @transform_8, window_bounds = array<i64: 1, 512>}, {pipeline_mode = #tpu.pipeline_mode<synchronous>, transform_indices = @transform_9, window_bounds = array<i64: 512, 128>}, {pipeline_mode = #tpu.pipeline_mode<synchronous>, transform_indices = @transform_10, window_bounds = array<i64: 1, 128>}, {transform_indices = @transform_11, window_bounds = array<i64: 8, 128>}]} {
    %c0_i32 = arith.constant 0 : i32
    %0 = arith.cmpi eq, %arg1, %c0_i32 : i32
    %1 = arith.extui %0 : i1 to i32
    %c0_i32_0 = arith.constant 0 : i32
    %2 = arith.cmpi ne, %1, %c0_i32_0 : i32
    scf.if %2 {
      %cst_8 = arith.constant 0.000000e+00 : f32
      %12 = vector.broadcast %cst_8 : f32 to vector<8x48xf32>
      %c0_9 = arith.constant 0 : index
      %c0_10 = arith.constant 0 : index
      %13 = vector.load %arg14[%c0_9, %c0_10] : memref<8x48xf32, #tpu.memory_space<vmem>>, vector<8x48xf32>
      tpu.vector_store %arg14[%c0_9, %c0_10], %12 {strides = array<i32>} : memref<8x48xf32, #tpu.memory_space<vmem>>, vector<8x48xf32>,
    } else {
    }
    %c0 = arith.constant 0 : index
    %c0_1 = arith.constant 0 : index
    %3 = vector.load %arg14[%c0, %c0_1] : memref<8x48xf32, #tpu.memory_space<vmem>>, vector<8x48xf32>
    %c0_2 = arith.constant 0 : index
    %c0_3 = arith.constant 0 : index
    %c0_4 = arith.constant 0 : index
    %4 = vector.load %arg2[%c0_2, %c0_3, %c0_4] : memref<8x8x48xbf16, #tpu.memory_space<vmem>>, vector<8x8x48xbf16>
    %5 = arith.extf %4 : vector<8x8x48xbf16> to vector<8x8x48xf32>
    %cst = arith.constant dense<0.000000e+00> : vector<8x48xf32>
    %6 = vector.multi_reduction <add>, %5, %cst [0] : vector<8x8x48xf32> to vector<8x48xf32>
    %7 = arith.addf %3, %6 : vector<8x48xf32>
    %c0_5 = arith.constant 0 : index
    %c0_6 = arith.constant 0 : index
    %8 = vector.load %arg14[%c0_5, %c0_6] : memref<8x48xf32, #tpu.memory_space<vmem>>, vector<8x48xf32>
    tpu.vector_store %arg14[%c0_5, %c0_6], %7 {strides = array<i32>} : memref<8x48xf32, #tpu.memory_space<vmem>>, vector<8x48xf32>,
    %c1_i32 = arith.constant 1 : i32
    %9 = arith.cmpi eq, %arg1, %c1_i32 : i32
    %10 = arith.extui %9 : i1 to i32
    %c0_i32_7 = arith.constant 0 : i32
    %11 = arith.cmpi ne, %10, %c0_i32_7 : i32
    scf.if %11 {
      %c0_8 = arith.constant 0 : index
      %c0_9 = arith.constant 0 : index
      %12 = vector.load %arg14[%c0_8, %c0_9] : memref<8x48xf32, #tpu.memory_space<vmem>>, vector<8x48xf32>
      %cst_10 = arith.constant 6.250000e-02 : f32
      %13 = vector.broadcast %cst_10 : f32 to vector<8x48xf32>
      %14 = arith.mulf %12, %13 : vector<8x48xf32>
      %15 = arith.truncf %14 : vector<8x48xf32> to vector<8x48xbf16>
      %c0_11 = arith.constant 0 : index
      %c0_12 = arith.constant 0 : index
      %16 = vector.load %arg3[%c0_11, %c0_12] : memref<48x768xbf16, #tpu.memory_space<vmem>>, vector<48x768xbf16>
      %cst_13 = arith.constant dense<0.000000e+00> : vector<8x768xf32>
      %17 = tpu.matmul %15, %16, %cst_13 {dimension_numbers = #tpu.dot_dimension_numbers<[1], [0], [0], [1], [0, 0, 1, 1], [], []>} : vector<8x48xbf16>, vector<48x768xbf16>, vector<8x768xf32> -> vector<8x768xf32>
      %c0_14 = arith.constant 0 : index
      %c0_15 = arith.constant 0 : index
      %18 = vector.load %arg4[%c0_14, %c0_15] : memref<1x768xf32, #tpu.memory_space<vmem>>, vector<1x768xf32>
      %19 = vector.broadcast %18 : vector<1x768xf32> to vector<8x768xf32>
      %20 = arith.addf %17, %19 : vector<8x768xf32>
      %cst_16 = arith.constant dense<0.000000e+00> : vector<8xf32>
      %21 = vector.multi_reduction <add>, %20, %cst_16 [1] : vector<8x768xf32> to vector<8xf32>
      %22 = vector.shape_cast %21 : vector<8xf32> to vector<8x1xf32>
      %cst_17 = arith.constant 7.680000e+02 : f32
      %23 = vector.broadcast %cst_17 : f32 to vector<8x1xf32>
      %24 = arith.divf %22, %23 : vector<8x1xf32>
      %25 = vector.broadcast %24 : vector<8x1xf32> to vector<8x768xf32>
      %26 = arith.subf %20, %25 : vector<8x768xf32>
      %27 = arith.mulf %26, %26 : vector<8x768xf32>
      %cst_18 = arith.constant dense<0.000000e+00> : vector<8xf32>
      %28 = vector.multi_reduction <add>, %27, %cst_18 [1] : vector<8x768xf32> to vector<8xf32>
      %29 = vector.shape_cast %28 : vector<8xf32> to vector<8x1xf32>
      %cst_19 = arith.constant 7.680000e+02 : f32
      %30 = vector.broadcast %cst_19 : f32 to vector<8x1xf32>
      %31 = arith.divf %29, %30 : vector<8x1xf32>
      %32 = vector.broadcast %24 : vector<8x1xf32> to vector<8x768xf32>
      %33 = arith.subf %20, %32 : vector<8x768xf32>
      %cst_20 = arith.constant 9.99999997E-7 : f32
      %34 = vector.broadcast %cst_20 : f32 to vector<8x1xf32>
      %35 = arith.addf %31, %34 : vector<8x1xf32>
      %36 = math.rsqrt %35 : vector<8x1xf32>
      %37 = vector.broadcast %36 : vector<8x1xf32> to vector<8x768xf32>
      %38 = arith.mulf %33, %37 : vector<8x768xf32>
      %c0_21 = arith.constant 0 : index
      %c0_22 = arith.constant 0 : index
      %39 = vector.load %arg6[%c0_21, %c0_22] : memref<1x768xf32, #tpu.memory_space<vmem>>, vector<1x768xf32>
      %40 = vector.broadcast %39 : vector<1x768xf32> to vector<8x768xf32>
      %41 = arith.mulf %38, %40 : vector<8x768xf32>
      %c0_23 = arith.constant 0 : index
      %c0_24 = arith.constant 0 : index
      %42 = vector.load %arg7[%c0_23, %c0_24] : memref<1x768xf32, #tpu.memory_space<vmem>>, vector<1x768xf32>
      %43 = vector.broadcast %42 : vector<1x768xf32> to vector<8x768xf32>
      %44 = arith.addf %41, %43 : vector<8x768xf32>
      %45 = arith.truncf %44 : vector<8x768xf32> to vector<8x768xbf16>
      %c0_25 = arith.constant 0 : index
      %c0_26 = arith.constant 0 : index
      %46 = vector.load %arg8[%c0_25, %c0_26] : memref<768x512xbf16, #tpu.memory_space<vmem>>, vector<768x512xbf16>
      %cst_27 = arith.constant dense<0.000000e+00> : vector<8x512xf32>
      %47 = tpu.matmul %45, %46, %cst_27 {dimension_numbers = #tpu.dot_dimension_numbers<[1], [0], [0], [1], [0, 0, 1, 1], [], []>} : vector<8x768xbf16>, vector<768x512xbf16>, vector<8x512xf32> -> vector<8x512xf32>
      %c0_28 = arith.constant 0 : index
      %c0_29 = arith.constant 0 : index
      %48 = vector.load %arg5[%c0_28, %c0_29] : memref<8x1xf32, #tpu.memory_space<vmem>>, vector<8x1xf32>
      %c0_30 = arith.constant 0 : index
      %c0_31 = arith.constant 0 : index
      %49 = vector.load %arg9[%c0_30, %c0_31] : memref<1x512xf32, #tpu.memory_space<vmem>>, vector<1x512xf32>
      %50 = vector.broadcast %48 : vector<8x1xf32> to vector<8x512xf32>
      %51 = vector.broadcast %49 : vector<1x512xf32> to vector<8x512xf32>
      %52 = arith.mulf %50, %51 : vector<8x512xf32>
      %53 = arith.addf %47, %52 : vector<8x512xf32>
      %c0_32 = arith.constant 0 : index
      %c0_33 = arith.constant 0 : index
      %54 = vector.load %arg10[%c0_32, %c0_33] : memref<1x512xf32, #tpu.memory_space<vmem>>, vector<1x512xf32>
      %55 = vector.broadcast %54 : vector<1x512xf32> to vector<8x512xf32>
      %56 = arith.addf %53, %55 : vector<8x512xf32>
      %cst_34 = arith.constant 0.000000e+00 : f32
      %57 = vector.broadcast %cst_34 : f32 to vector<8x512xf32>
      %58 = arith.maximumf %56, %57 : vector<8x512xf32>
      %59 = arith.truncf %58 : vector<8x512xf32> to vector<8x512xbf16>
      %c0_35 = arith.constant 0 : index
      %c0_36 = arith.constant 0 : index
      %60 = vector.load %arg11[%c0_35, %c0_36] : memref<512x128xbf16, #tpu.memory_space<vmem>>, vector<512x128xbf16>
      %cst_37 = arith.constant dense<0.000000e+00> : vector<8x128xf32>
      %61 = tpu.matmul %59, %60, %cst_37 {dimension_numbers = #tpu.dot_dimension_numbers<[1], [0], [0], [1], [0, 0, 1, 1], [], []>} : vector<8x512xbf16>, vector<512x128xbf16>, vector<8x128xf32> -> vector<8x128xf32>
      %c0_38 = arith.constant 0 : index
      %c0_39 = arith.constant 0 : index
      %62 = vector.load %arg12[%c0_38, %c0_39] : memref<1x128xf32, #tpu.memory_space<vmem>>, vector<1x128xf32>
      %63 = vector.broadcast %62 : vector<1x128xf32> to vector<8x128xf32>
      %64 = arith.addf %61, %63 : vector<8x128xf32>
      %c0_40 = arith.constant 0 : index
      %c0_41 = arith.constant 0 : index
      %65 = vector.load %arg13[%c0_40, %c0_41] : memref<8x128xf32, #tpu.memory_space<vmem>>, vector<8x128xf32>
      tpu.vector_store %arg13[%c0_40, %c0_41], %64 {strides = array<i32>} : memref<8x128xf32, #tpu.memory_space<vmem>>, vector<8x128xf32>,
    } else {
    }
    return
  }
  func.func @transform_0(%arg0: i32, %arg1: i32) -> (i32, i32, i32) {
    %c0_i32 = arith.constant 0 : i32
    %c0_i32_0 = arith.constant 0 : i32
    return %arg1, %arg0, %c0_i32 : i32, i32, i32
  }
  func.func @transform_1(%arg0: i32, %arg1: i32) -> (i32, i32) {
    %c0_i32 = arith.constant 0 : i32
    %c0_i32_0 = arith.constant 0 : i32
    %c0_i32_1 = arith.constant 0 : i32
    return %c0_i32, %c0_i32_0 : i32, i32
  }
  func.func @transform_2(%arg0: i32, %arg1: i32) -> (i32, i32) {
    %c0_i32 = arith.constant 0 : i32
    %c0_i32_0 = arith.constant 0 : i32
    %c0_i32_1 = arith.constant 0 : i32
    return %c0_i32, %c0_i32_0 : i32, i32
  }
  func.func @transform_3(%arg0: i32, %arg1: i32) -> (i32, i32) {
    %c0_i32 = arith.constant 0 : i32
    %c0_i32_0 = arith.constant 0 : i32
    return %arg0, %c0_i32 : i32, i32
  }
  func.func @transform_4(%arg0: i32, %arg1: i32) -> (i32, i32) {
    %c0_i32 = arith.constant 0 : i32
    %c0_i32_0 = arith.constant 0 : i32
    %c0_i32_1 = arith.constant 0 : i32
    return %c0_i32, %c0_i32_0 : i32, i32
  }
  func.func @transform_5(%arg0: i32, %arg1: i32) -> (i32, i32) {
    %c0_i32 = arith.constant 0 : i32
    %c0_i32_0 = arith.constant 0 : i32
    %c0_i32_1 = arith.constant 0 : i32
    return %c0_i32, %c0_i32_0 : i32, i32
  }
  func.func @transform_6(%arg0: i32, %arg1: i32) -> (i32, i32) {
    %c0_i32 = arith.constant 0 : i32
    %c0_i32_0 = arith.constant 0 : i32
    %c0_i32_1 = arith.constant 0 : i32
    return %c0_i32, %c0_i32_0 : i32, i32
  }
  func.func @transform_7(%arg0: i32, %arg1: i32) -> (i32, i32) {
    %c0_i32 = arith.constant 0 : i32
    %c0_i32_0 = arith.constant 0 : i32
    %c0_i32_1 = arith.constant 0 : i32
    return %c0_i32, %c0_i32_0 : i32, i32
  }
  func.func @transform_8(%arg0: i32, %arg1: i32) -> (i32, i32) {
    %c0_i32 = arith.constant 0 : i32
    %c0_i32_0 = arith.constant 0 : i32
    %c0_i32_1 = arith.constant 0 : i32
    return %c0_i32, %c0_i32_0 : i32, i32
  }
  func.func @transform_9(%arg0: i32, %arg1: i32) -> (i32, i32) {
    %c0_i32 = arith.constant 0 : i32
    %c0_i32_0 = arith.constant 0 : i32
    %c0_i32_1 = arith.constant 0 : i32
    return %c0_i32, %c0_i32_0 : i32, i32
  }
  func.func @transform_10(%arg0: i32, %arg1: i32) -> (i32, i32) {
    %c0_i32 = arith.constant 0 : i32
    %c0_i32_0 = arith.constant 0 : i32
    %c0_i32_1 = arith.constant 0 : i32
    return %c0_i32, %c0_i32_0 : i32, i32
  }
  func.func @transform_11(%arg0: i32, %arg1: i32) -> (i32, i32) {
    %c0_i32 = arith.constant 0 : i32
    %c0_i32_0 = arith.constant 0 : i32
    return %arg0, %c0_i32 : i32, i32
  }
}

</mosaic_0001>

<llo_original>
// kernel: convnext_with_cellcount_forward.1
$region0: #{convnext_with_cellcount_forward.1}
  #allocation0 [shape = 'u32[]', space=smem, size = 0x4, offset = 0x4, fixed_abs, tag = 'smem constant byte address 0x4 - core index']
  #allocation1 [shape = 'u32[144,128]{1,0:T(1,128)}', space=vmem, size = 0x12000, scoped, tag = 'internal scratch']
  #allocation2 [shape = 'f32[8,48]{1,0:T(8,128)}', space=vmem, size = 0x1000, scoped, tag = 'scratch operand']
  %s0 = inlined_call_operand.vmem [shape: bf16[16,8,48], index: 0, kind: input, shape index: {}]
  %s1 = inlined_call_operand.vmem [shape: bf16[48,768], index: 1, kind: input, shape index: {}]
  %s2 = inlined_call_operand.vmem [shape: f32[1,768], index: 2, kind: input, shape index: {}]
  %s3 = inlined_call_operand.vmem [shape: f32[8,1], index: 3, kind: input, shape index: {}]
  %s4 = inlined_call_operand.vmem [shape: f32[1,768], index: 4, kind: input, shape index: {}]
  %s5 = inlined_call_operand.vmem [shape: f32[1,768], index: 5, kind: input, shape index: {}]
  %s6 = inlined_call_operand.hbm [shape: bf16[768,512], index: 6, kind: input, shape index: {}]
  %s7 = inlined_call_operand.vmem [shape: f32[1,512], index: 7, kind: input, shape index: {}]
  %s8 = inlined_call_operand.vmem [shape: f32[1,512], index: 8, kind: input, shape index: {}]
  %s9 = inlined_call_operand.vmem [shape: bf16[512,128], index: 9, kind: input, shape index: {}]
  %s10 = inlined_call_operand.vmem [shape: f32[1,128], index: 10, kind: input, shape index: {}]
  %s11 = inlined_call_operand.vmem [shape: f32[8,128], index: 11, kind: output, shape index: {}]
  %s12 = sld [smem:[#allocation0]]
  $region89: #{convnext_with_cellcount_forward.1} parent=0
    _
  %s14 = ssub.s32 1, %s12
  %s15 = scalar_select 0, %s14, %s12
  $region1: #{convnext_with_cellcount_forward.1} parent=0
    #allocation3 [shape = 'u8[786432]{0}', space=vmem, size = 0xc0000, scoped, tag = 'input window, operand 6, single buffered']
    #allocation4 [shape = 's32[2]{0}', space=sflag, size = 0x8, scoped, tag = 'scoped memory for convnext_with_cellcount_forward.1']
    %16 = vsyncpa [#allocation4], 0
    loop: start=0, step=1, limit=4
    $region2: #{convnext_with_cellcount_forward.1} parent=1 // loop_pre_header
      _
    $region3: #{convnext_with_cellcount_forward.1} parent=1 // loop_header
      %s18 = sphi 0, %s22
      %p19 = scmp.ge.s32.totalorder %s18, 4
      %s25 = sphi 0, %s37
      %s26 = sphi 0, %s33
      %s27 = sphi 0, %s25
      %s28 = sphi 0, %s26
      %s29 = sphi 0, %s27
      %s30 = sphi 0, %s28
      %s42 = sphi 0, %s44
      %s45 = sphi 0, %s42
      %s46 = sphi 0, %s45
      %s62 = sphi 0, %s46
      %s66 = sphi 0, %s66
      %s68 = sphi 0, %s66
      %s69 = sphi 0, %s68
      %s83 = sphi 0, %s69
      %s87 = sphi 0, %s87
      %s89 = sphi 0, %s87
      %s90 = sphi 0, %s89
      %s104 = sphi 0, %s90
      %s110 = sphi 0, %s112
      %s113 = sphi 0, %s110
      %s114 = sphi 0, %s113
      %s130 = sphi 0, %s114
      %s134 = sphi 0, %s134
      %s136 = sphi 0, %s134
      %s137 = sphi 0, %s136
      %s151 = sphi 0, %s137
      %s155 = sphi 0, %s155
      %s157 = sphi 0, %s155
      %s158 = sphi 0, %s157
      %s172 = sphi 0, %s158
      %s176 = sphi 0, %s176
      %s178 = sphi 0, %s176
      %s179 = sphi 0, %s178
      %s193 = sphi 0, %s179
      %s197 = sphi 0, %s197
      %s199 = sphi 0, %s197
      %s200 = sphi 0, %s199
      %s214 = sphi 0, %s200
      %s218 = sphi 0, %s218
      %s220 = sphi 0, %s218
      %s221 = sphi 0, %s220
      %s235 = sphi 0, %s221
      %s239 = sphi 0, %s239
      %s241 = sphi 0, %s239
      %s242 = sphi 0, %s241
      %s256 = sphi 0, %s242
      %s260 = sphi 0, %s260
      %s262 = sphi 0, %s260
      %s263 = sphi 0, %s262
      %s277 = sphi 0, %s263
      %s283 = sphi 0, %s285
      %s286 = sphi 0, %s283
      %s287 = sphi 0, %s286
      %s303 = sphi 0, %s287
    $region4: #{convnext_with_cellcount_forward.1} parent=1 // loop_header_branch
      %21 = sbr.rel (%p19) target = $region8
    $region5: #{convnext_with_cellcount_forward.1} parent=1 // loop_body
      %s23 = ssub.s32 %s18, 1
      %s24 = ssub.s32 %s18, 2
      %s31 = sadd.s32 1, %s26
      %p32 = scmp.ge.s32.totalorder %s31, 2
      %s33 = scalar_select %p32, 0, %s31
      %s34 = sadd.s32 1, %s25
      %s35 = scalar_select %p32, %s34, %s25
      %p36 = scmp.ge.s32.totalorder %s35, 1
      %s37 = scalar_select %p36, 0, %s35
      %s38 = ssub.s32 %s26, %s33
      %s39 = ssub.s32 %s25, %s37
      %s40 = sor.u32 %s38, %s39
      %p41 = scmp.eq.s32.totalorder %s40, 0
      %s43 = sadd.s32 %s42, 1
      %s44 = scalar_select %p41, %s42, %s43
      %p47 = pneg %p41
      %p48 = scmp.eq.s32.totalorder %s18, 1
      %p49 = por %p47, %p48
      %p50 = scmp.ne.s32.totalorder %s42, %s45
      %p51 = scmp.eq.s32.totalorder %s18, 0
      %p52 = por %p50, %p51
      %p53 = scmp.ne.s32.totalorder %s42, %s45
      %p54 = scmp.eq.s32.totalorder %s23, 1
      %p55 = por %p53, %p54
      %p56 = scmp.ne.s32.totalorder %s45, %s46
      %p57 = scmp.eq.s32.totalorder %s23, 0
      %p58 = por %p56, %p57
      %p59 = scmp.ne.s32.totalorder %s45, %s46
      %p60 = scmp.eq.s32.totalorder %s24, 1
      %p61 = por %p59, %p60
      %p63 = scmp.ne.s32.totalorder %s46, %s62
      %p64 = scmp.eq.s32.totalorder %s24, 0
      %p65 = por %p63, %p64
      %s67 = sadd.s32 %s66, 1
      %p70 = scmp.eq.s32.totalorder %s18, 1
      %p71 = scmp.ne.s32.totalorder %s66, %s68
      %p72 = scmp.eq.s32.totalorder %s18, 0
      %p73 = por %p71, %p72
      %p74 = scmp.ne.s32.totalorder %s66, %s68
      %p75 = scmp.eq.s32.totalorder %s23, 1
      %p76 = por %p74, %p75
      %p77 = scmp.ne.s32.totalorder %s68, %s69
      %p78 = scmp.eq.s32.totalorder %s23, 0
      %p79 = por %p77, %p78
      %p80 = scmp.ne.s32.totalorder %s68, %s69
      %p81 = scmp.eq.s32.totalorder %s24, 1
      %p82 = por %p80, %p81
      %p84 = scmp.ne.s32.totalorder %s69, %s83
      %p85 = scmp.eq.s32.totalorder %s24, 0
      %p86 = por %p84, %p85
      %s88 = sadd.s32 %s87, 1
      %p91 = scmp.eq.s32.totalorder %s18, 1
      %p92 = scmp.ne.s32.totalorder %s87, %s89
      %p93 = scmp.eq.s32.totalorder %s18, 0
      %p94 = por %p92, %p93
      %p95 = scmp.ne.s32.totalorder %s87, %s89
      %p96 = scmp.eq.s32.totalorder %s23, 1
      %p97 = por %p95, %p96
      %p98 = scmp.ne.s32.totalorder %s89, %s90
      %p99 = scmp.eq.s32.totalorder %s23, 0
      %p100 = por %p98, %p99
      %p101 = scmp.ne.s32.totalorder %s89, %s90
      %p102 = scmp.eq.s32.totalorder %s24, 1
      %p103 = por %p101, %p102
      %p105 = scmp.ne.s32.totalorder %s90, %s104
      %p106 = scmp.eq.s32.totalorder %s24, 0
      %p107 = por %p105, %p106
      %s108 = ssub.s32 %s25, %s37
      %p109 = scmp.eq.s32.totalorder %s108, 0
      %s111 = sadd.s32 %s110, 1
      %s112 = scalar_select %p109, %s110, %s111
      %p115 = pneg %p109
      %p116 = scmp.eq.s32.totalorder %s18, 1
      %p117 = por %p115, %p116
      %p118 = scmp.ne.s32.totalorder %s110, %s113
      %p119 = scmp.eq.s32.totalorder %s18, 0
      %p120 = por %p118, %p119
      %p121 = scmp.ne.s32.totalorder %s110, %s113
      %p122 = scmp.eq.s32.totalorder %s23, 1
      %p123 = por %p121, %p122
      %p124 = scmp.ne.s32.totalorder %s113, %s114
      %p125 = scmp.eq.s32.totalorder %s23, 0
      %p126 = por %p124, %p125
      %p127 = scmp.ne.s32.totalorder %s113, %s114
      %p128 = scmp.eq.s32.totalorder %s24, 1
      %p129 = por %p127, %p128
      %p131 = scmp.ne.s32.totalorder %s114, %s130
      %p132 = scmp.eq.s32.totalorder %s24, 0
      %p133 = por %p131, %p132
      %s135 = sadd.s32 %s134, 1
      %p138 = scmp.eq.s32.totalorder %s18, 1
      %p139 = scmp.ne.s32.totalorder %s134, %s136
      %p140 = scmp.eq.s32.totalorder %s18, 0
      %p141 = por %p139, %p140
      %p142 = scmp.ne.s32.totalorder %s134, %s136
      %p143 = scmp.eq.s32.totalorder %s23, 1
      %p144 = por %p142, %p143
      %p145 = scmp.ne.s32.totalorder %s136, %s137
      %p146 = scmp.eq.s32.totalorder %s23, 0
      %p147 = por %p145, %p146
      %p148 = scmp.ne.s32.totalorder %s136, %s137
      %p149 = scmp.eq.s32.totalorder %s24, 1
      %p150 = por %p148, %p149
      %p152 = scmp.ne.s32.totalorder %s137, %s151
      %p153 = scmp.eq.s32.totalorder %s24, 0
      %p154 = por %p152, %p153
      %s156 = sadd.s32 %s155, 1
      %p159 = scmp.eq.s32.totalorder %s18, 1
      %p160 = scmp.ne.s32.totalorder %s155, %s157
      %p161 = scmp.eq.s32.totalorder %s18, 0
      %p162 = por %p160, %p161
      %p163 = scmp.ne.s32.totalorder %s155, %s157
      %p164 = scmp.eq.s32.totalorder %s23, 1
      %p165 = por %p163, %p164
      %p166 = scmp.ne.s32.totalorder %s157, %s158
      %p167 = scmp.eq.s32.totalorder %s23, 0
      %p168 = por %p166, %p167
      %p169 = scmp.ne.s32.totalorder %s157, %s158
      %p170 = scmp.eq.s32.totalorder %s24, 1
      %p171 = por %p169, %p170
      %p173 = scmp.ne.s32.totalorder %s158, %s172
      %p174 = scmp.eq.s32.totalorder %s24, 0
      %p175 = por %p173, %p174
      %s177 = sadd.s32 %s176, 1
      %p180 = scmp.eq.s32.totalorder %s18, 1
      %p181 = scmp.ne.s32.totalorder %s176, %s178
      %p182 = scmp.eq.s32.totalorder %s18, 0
      %p183 = por %p181, %p182
      %p184 = scmp.ne.s32.totalorder %s176, %s178
      %p185 = scmp.eq.s32.totalorder %s23, 1
      %p186 = por %p184, %p185
      %p187 = scmp.ne.s32.totalorder %s178, %s179
      %p188 = scmp.eq.s32.totalorder %s23, 0
      %p189 = por %p187, %p188
      %p190 = scmp.ne.s32.totalorder %s178, %s179
      %p191 = scmp.eq.s32.totalorder %s24, 1
      %p192 = por %p190, %p191
      %p194 = scmp.ne.s32.totalorder %s179, %s193
      %p195 = scmp.eq.s32.totalorder %s24, 0
      %p196 = por %p194, %p195
      %s198 = sadd.s32 %s197, 1
      %p201 = scmp.eq.s32.totalorder %s18, 1
      %p202 = scmp.ne.s32.totalorder %s197, %s199
      %p203 = scmp.eq.s32.totalorder %s18, 0
      %p204 = por %p202, %p203
      %p205 = scmp.ne.s32.totalorder %s197, %s199
      %p206 = scmp.eq.s32.totalorder %s23, 1
      %p207 = por %p205, %p206
      %p208 = scmp.ne.s32.totalorder %s199, %s200
      %p209 = scmp.eq.s32.totalorder %s23, 0
      %p210 = por %p208, %p209
      %p211 = scmp.ne.s32.totalorder %s199, %s200
      %p212 = scmp.eq.s32.totalorder %s24, 1
      %p213 = por %p211, %p212
      %p215 = scmp.ne.s32.totalorder %s200, %s214
      %p216 = scmp.eq.s32.totalorder %s24, 0
      %p217 = por %p215, %p216
      %s219 = sadd.s32 %s218, 1
      %p222 = scmp.eq.s32.totalorder %s18, 1
      %p223 = scmp.ne.s32.totalorder %s218, %s220
      %p224 = scmp.eq.s32.totalorder %s18, 0
      %p225 = por %p223, %p224
      %p226 = scmp.ne.s32.totalorder %s218, %s220
      %p227 = scmp.eq.s32.totalorder %s23, 1
      %p228 = por %p226, %p227
      %p229 = scmp.ne.s32.totalorder %s220, %s221
      %p230 = scmp.eq.s32.totalorder %s23, 0
      %p231 = por %p229, %p230
      %p232 = scmp.ne.s32.totalorder %s220, %s221
      %p233 = scmp.eq.s32.totalorder %s24, 1
      %p234 = por %p232, %p233
      %p236 = scmp.ne.s32.totalorder %s221, %s235
      %p237 = scmp.eq.s32.totalorder %s24, 0
      %p238 = por %p236, %p237
      %s240 = sadd.s32 %s239, 1
      %p243 = scmp.eq.s32.totalorder %s18, 1
      %p244 = scmp.ne.s32.totalorder %s239, %s241
      %p245 = scmp.eq.s32.totalorder %s18, 0
      %p246 = por %p244, %p245
      %p247 = scmp.ne.s32.totalorder %s239, %s241
      %p248 = scmp.eq.s32.totalorder %s23, 1
      %p249 = por %p247, %p248
      %p250 = scmp.ne.s32.totalorder %s241, %s242
      %p251 = scmp.eq.s32.totalorder %s23, 0
      %p252 = por %p250, %p251
      %p253 = scmp.ne.s32.totalorder %s241, %s242
      %p254 = scmp.eq.s32.totalorder %s24, 1
      %p255 = por %p253, %p254
      %p257 = scmp.ne.s32.totalorder %s242, %s256
      %p258 = scmp.eq.s32.totalorder %s24, 0
      %p259 = por %p257, %p258
      %s261 = sadd.s32 %s260, 1
      %p264 = scmp.eq.s32.totalorder %s18, 1
      %p265 = scmp.ne.s32.totalorder %s260, %s262
      %p266 = scmp.eq.s32.totalorder %s18, 0
      %p267 = por %p265, %p266
      %p268 = scmp.ne.s32.totalorder %s260, %s262
      %p269 = scmp.eq.s32.totalorder %s23, 1
      %p270 = por %p268, %p269
      %p271 = scmp.ne.s32.totalorder %s262, %s263
      %p272 = scmp.eq.s32.totalorder %s23, 0
      %p273 = por %p271, %p272
      %p274 = scmp.ne.s32.totalorder %s262, %s263
      %p275 = scmp.eq.s32.totalorder %s24, 1
      %p276 = por %p274, %p275
      %p278 = scmp.ne.s32.totalorder %s263, %s277
      %p279 = scmp.eq.s32.totalorder %s24, 0
      %p280 = por %p278, %p279
      %s281 = ssub.s32 %s25, %s37
      %p282 = scmp.eq.s32.totalorder %s281, 0
      %s284 = sadd.s32 %s283, 1
      %s285 = scalar_select %p282, %s283, %s284
      %p288 = pneg %p282
      %p289 = scmp.eq.s32.totalorder %s18, 1
      %p290 = por %p288, %p289
      %p291 = scmp.ne.s32.totalorder %s283, %s286
      %p292 = scmp.eq.s32.totalorder %s18, 0
      %p293 = por %p291, %p292
      %p294 = scmp.ne.s32.totalorder %s283, %s286
      %p295 = scmp.eq.s32.totalorder %s23, 1
      %p296 = por %p294, %p295
      %p297 = scmp.ne.s32.totalorder %s286, %s287
      %p298 = scmp.eq.s32.totalorder %s23, 0
      %p299 = por %p297, %p298
      %p300 = scmp.ne.s32.totalorder %s286, %s287
      %p301 = scmp.eq.s32.totalorder %s24, 1
      %p302 = por %p300, %p301
      %p304 = scmp.ne.s32.totalorder %s287, %s303
      %p305 = scmp.eq.s32.totalorder %s24, 0
      %p306 = por %p304, %p305
      %p307 = scmp.le.s32.totalorder 1, %s18
      %p308 = scmp.lt.s32.totalorder %s18, 3
      %p309 = pnand %p307, %p308
      %p310 = pneg %p309
      // Predicated region
      $region9: #{convnext_with_cellcount_forward.1} parent=5 // pred_check
        _
      $region10: #{convnext_with_cellcount_forward.1} parent=5 // pred_check_branch
        %312 = sbr.rel (%p309) target = $region12
      $region11: #{convnext_with_cellcount_forward.1} parent=5 // pred_region
        %s313 = ssub.s32 %s18, 1
        // Predicated region
        $region13: #{convnext_with_cellcount_forward.1} parent=11 // pred_check
          %p314 = pneg %p79
        $region14: #{convnext_with_cellcount_forward.1} parent=11 // pred_check_branch
          %316 = sbr.rel (%p314) target = $region16
        $region15: #{convnext_with_cellcount_forward.1} parent=11 // pred_region
          _
        $region16: #{convnext_with_cellcount_forward.1} parent=11 // pred_fallthru
          _
        // Predicated region
        $region17: #{convnext_with_cellcount_forward.1} parent=11 // pred_check
          %p317 = pneg %p100
        $region18: #{convnext_with_cellcount_forward.1} parent=11 // pred_check_branch
          %319 = sbr.rel (%p317) target = $region20
        $region19: #{convnext_with_cellcount_forward.1} parent=11 // pred_region
          _
        $region20: #{convnext_with_cellcount_forward.1} parent=11 // pred_fallthru
          _
        // Predicated region
        $region21: #{convnext_with_cellcount_forward.1} parent=11 // pred_check
          %p320 = pneg %p126
        $region22: #{convnext_with_cellcount_forward.1} parent=11 // pred_check_branch
          %322 = sbr.rel (%p320) target = $region24
        $region23: #{convnext_with_cellcount_forward.1} parent=11 // pred_region
          %p323 = scmp.lt.s32.totalorder %s27, 0
          %s324 = scalar_select %p323, %s27, 0
          %s325 = smul.addr %s324, 8
          %s326 = scalar_lea.vmem %s3, %s325
        $region24: #{convnext_with_cellcount_forward.1} parent=11 // pred_fallthru
          _
        // Predicated region
        $region25: #{convnext_with_cellcount_forward.1} parent=11 // pred_check
          %p327 = pneg %p147
        $region26: #{convnext_with_cellcount_forward.1} parent=11 // pred_check_branch
          %329 = sbr.rel (%p327) target = $region28
        $region27: #{convnext_with_cellcount_forward.1} parent=11 // pred_region
          _
        $region28: #{convnext_with_cellcount_forward.1} parent=11 // pred_fallthru
          _
        // Predicated region
        $region29: #{convnext_with_cellcount_forward.1} parent=11 // pred_check
          %p330 = pneg %p168
        $region30: #{convnext_with_cellcount_forward.1} parent=11 // pred_check_branch
          %332 = sbr.rel (%p330) target = $region32
        $region31: #{convnext_with_cellcount_forward.1} parent=11 // pred_region
          _
        $region32: #{convnext_with_cellcount_forward.1} parent=11 // pred_fallthru
          _
        // Predicated region
        $region33: #{convnext_with_cellcount_forward.1} parent=11 // pred_check
          %p333 = pneg %p189
        $region34: #{convnext_with_cellcount_forward.1} parent=11 // pred_check_branch
          %335 = sbr.rel (%p333) target = $region36
        $region35: #{convnext_with_cellcount_forward.1} parent=11 // pred_region
          %s337 = ssub.s32 24576, 24576
          %338 = vsyncadd [#allocation4], %s337
          %s339 = sshll.u32 [#allocation3], 4
          %s340 = int_to_ptr.vmem [resolvable:$true] %s339
          %345 = dma.hbm_to_vmem [thread:$0]  %s6, 24576, %s340, [#allocation4], 256, 256, 16
        $region36: #{convnext_with_cellcount_forward.1} parent=11 // pred_fallthru
          _
        // Predicated region
        $region37: #{convnext_with_cellcount_forward.1} parent=11 // pred_check
          %p346 = pneg %p210
        $region38: #{convnext_with_cellcount_forward.1} parent=11 // pred_check_branch
          %348 = sbr.rel (%p346) target = $region40
        $region39: #{convnext_with_cellcount_forward.1} parent=11 // pred_region
          _
        $region40: #{convnext_with_cellcount_forward.1} parent=11 // pred_fallthru
          _
        // Predicated region
        $region41: #{convnext_with_cellcount_forward.1} parent=11 // pred_check
          %p349 = pneg %p231
        $region42: #{convnext_with_cellcount_forward.1} parent=11 // pred_check_branch
          %351 = sbr.rel (%p349) target = $region44
        $region43: #{convnext_with_cellcount_forward.1} parent=11 // pred_region
          _
        $region44: #{convnext_with_cellcount_forward.1} parent=11 // pred_fallthru
          _
        // Predicated region
        $region45: #{convnext_with_cellcount_forward.1} parent=11 // pred_check
          %p352 = pneg %p252
        $region46: #{convnext_with_cellcount_forward.1} parent=11 // pred_check_branch
          %354 = sbr.rel (%p352) target = $region48
        $region47: #{convnext_with_cellcount_forward.1} parent=11 // pred_region
          _
        $region48: #{convnext_with_cellcount_forward.1} parent=11 // pred_fallthru
          _
        // Predicated region
        $region49: #{convnext_with_cellcount_forward.1} parent=11 // pred_check
          %p355 = pneg %p273
        $region50: #{convnext_with_cellcount_forward.1} parent=11 // pred_check_branch
          %357 = sbr.rel (%p355) target = $region52
        $region51: #{convnext_with_cellcount_forward.1} parent=11 // pred_region
          _
        $region52: #{convnext_with_cellcount_forward.1} parent=11 // pred_fallthru
          _
      $region12: #{convnext_with_cellcount_forward.1} parent=5 // pred_fallthru
        _
      %p358 = scmp.lt.s32.totalorder %s18, 2
      // Predicated region
      $region53: #{convnext_with_cellcount_forward.1} parent=5 // pred_check
        %p359 = pneg %p358
      $region54: #{convnext_with_cellcount_forward.1} parent=5 // pred_check_branch
        %361 = sbr.rel (%p359) target = $region56
      $region55: #{convnext_with_cellcount_forward.1} parent=5 // pred_region
        // Predicated region
        $region57: #{convnext_with_cellcount_forward.1} parent=55 // pred_check
          %p362 = pneg %p52
        $region58: #{convnext_with_cellcount_forward.1} parent=55 // pred_check_branch
          %364 = sbr.rel (%p362) target = $region60
        $region59: #{convnext_with_cellcount_forward.1} parent=55 // pred_region
          %s365 = smul.u32 8, %s26
          %p366 = scmp.lt.s32.totalorder %s365, 15
          %s367 = scalar_select %p366, %s365, 15
          %p368 = scmp.lt.s32.totalorder %s25, 0
          %s369 = scalar_select %p368, %s25, 0
          %s370 = sadd.s32 %s369, %s367
          %s371 = smul.addr %s370, 4
          %s372 = scalar_lea.vmem %s0, %s371
          %s373 = smul.u32 8, %s26
        $region60: #{convnext_with_cellcount_forward.1} parent=55 // pred_fallthru
          _
      $region56: #{convnext_with_cellcount_forward.1} parent=5 // pred_fallthru
        _
      %p374 = scmp.le.s32.totalorder 1, %s18
      %p375 = scmp.lt.s32.totalorder %s18, 3
      %p376 = pnand %p374, %p375
      %p377 = pneg %p376
      // Predicated region
      $region61: #{convnext_with_cellcount_forward.1} parent=5 // pred_check
        _
      $region62: #{convnext_with_cellcount_forward.1} parent=5 // pred_check_branch
        %379 = sbr.rel (%p376) target = $region64
      $region63: #{convnext_with_cellcount_forward.1} parent=5 // pred_region
        %s380 = ssub.s32 %s18, 1
        // Predicated region
        $region65: #{convnext_with_cellcount_forward.1} parent=63 // pred_check
          %p381 = pneg %p189
        $region66: #{convnext_with_cellcount_forward.1} parent=63 // pred_check_branch
          %383 = sbr.rel (%p381) target = $region68
        $region67: #{convnext_with_cellcount_forward.1} parent=63 // pred_region
          %384 = dma.done [#allocation4], 24576
        $region68: #{convnext_with_cellcount_forward.1} parent=63 // pred_fallthru
          _
        %s385 = smul.u32 8, %s28
        %p386 = scmp.lt.s32.totalorder %s385, 15
        %s387 = scalar_select %p386, %s385, 15
        %p388 = scmp.lt.s32.totalorder %s27, 0
        %s389 = scalar_select %p388, %s27, 0
        %s390 = sadd.s32 %s389, %s387
        %s391 = smul.addr %s390, 4
        %s392 = scalar_lea.vmem %s0, %s391
        %p393 = pneg %p58
        %p394 = pneg %p55
        %p395 = pneg %p79
        %p396 = pneg %p76
        %p397 = pneg %p100
        %p398 = pneg %p97
        %p399 = scmp.lt.s32.totalorder %s27, 0
        %s400 = scalar_select %p399, %s27, 0
        %s401 = smul.addr %s400, 8
        %s402 = scalar_lea.vmem %s3, %s401
        %p403 = pneg %p126
        %p404 = pneg %p123
        %p405 = pneg %p147
        %p406 = pneg %p144
        %p407 = pneg %p168
        %p408 = pneg %p165
        %p409 = pneg %p189
        %p410 = pneg %p186
        %p411 = pneg %p210
        %p412 = pneg %p207
        %p413 = pneg %p231
        %p414 = pneg %p228
        %p415 = pneg %p252
        %p416 = pneg %p249
        %p417 = pneg %p273
        %p418 = pneg %p270
        %p419 = pneg %p299
        %p420 = pneg %p296
        %p421 = scmp.lt.s32.totalorder %s27, 0
        %s422 = scalar_select %p421, %s27, 0
        %s423 = smul.addr %s422, 8
        %s424 = scalar_lea.vmem %s11, %s423
        %s425 = smul.u32 8, %s28
        %p426 = scmp.lt.s32.totalorder %s425, 15
        %s427 = scalar_select %p426, %s425, 15
        %p428 = scmp.lt.s32.totalorder %s27, 0
        %s429 = scalar_select %p428, %s27, 0
        %s430 = sadd.s32 %s429, %s427
        %s431 = smul.addr %s430, 4
        %s432 = scalar_lea.vmem %s0, %s431
        %s433 = smul.u32 8, %s28
        %p434 = scmp.lt.s32.totalorder %s27, 0
        %s435 = scalar_select %p434, %s27, 0
        %s436 = smul.addr %s435, 8
        %s437 = scalar_lea.vmem %s3, %s436
        %p438 = scmp.lt.s32.totalorder %s27, 0
        %s439 = scalar_select %p438, %s27, 0
        %s440 = smul.addr %s439, 8
        %s441 = scalar_lea.vmem %s11, %s440
        %p443 = scmp.eq.s32.totalorder %s28, 0
        // Predicated region
        $region69: #{convnext_with_cellcount_forward.1} parent=63 // pred_check
          %p444 = pneg %p443
        $region70: #{convnext_with_cellcount_forward.1} parent=63 // pred_check_branch
          %446 = sbr.rel (%p444) target = $region72
        $region71: #{convnext_with_cellcount_forward.1} parent=63 // pred_region
          %vm447 = vcmask 392192
          %448 = vst.msk [vmem:[#allocation2] sm:$0xff] %vm447, 0.0
        $region72: #{convnext_with_cellcount_forward.1} parent=63 // pred_fallthru
          _
        %v449 = vld [vmem:[#allocation2] sm:$0xff]
        %v450 = vld [vmem:[%s432] sm:$0xf]
        %v451 = vld [vmem:[%s432 + $0x4] sm:$0xf]
        %v452 = vld [vmem:[%s432 + $0x8] sm:$0xf]
        %v453 = vld [vmem:[%s432 + $0xc] sm:$0xf]
        %v454 = vld [vmem:[%s432 + $0x10] sm:$0xf]
        %v455 = vld [vmem:[%s432 + $0x14] sm:$0xf]
        %v456 = vld [vmem:[%s432 + $0x18] sm:$0xf]
        %v457 = vld [vmem:[%s432 + $0x1c] sm:$0xf]
        %v458 = vunpack.c.l.bf16 %v450
        %v459 = vunpack.c.l.bf16 %v451
        %v460 = vunpack.c.l.bf16 %v452
        %v461 = vunpack.c.l.bf16 %v453
        %v462 = vunpack.c.l.bf16 %v454
        %v463 = vunpack.c.l.bf16 %v455
        %v464 = vunpack.c.l.bf16 %v456
        %v465 = vunpack.c.l.bf16 %v457
        %vm466 = vcmask 392192
        %v467 = vsel %vm466, %v458, 0.0
        %v468 = vsel %vm466, %v459, 0.0
        %v469 = vadd.f32 %v467, %v468
        %v470 = vsel %vm466, %v460, 0.0
        %v471 = vadd.f32 %v469, %v470
        %v472 = vsel %vm466, %v461, 0.0
        %v473 = vadd.f32 %v471, %v472
        %v474 = vsel %vm466, %v462, 0.0
        %v475 = vadd.f32 %v473, %v474
        %v476 = vsel %vm466, %v463, 0.0
        %v477 = vadd.f32 %v475, %v476
        %v478 = vsel %vm466, %v464, 0.0
        %v479 = vadd.f32 %v477, %v478
        %v480 = vsel %vm466, %v465, 0.0
        %v481 = vadd.f32 %v479, %v480
        %v482 = vadd.f32 %v449, %v481
        %483 = vst.msk [vmem:[#allocation2] sm:$0xff] %vm466, %v482
        %p484 = scmp.eq.s32.totalorder %s28, 1
        // Predicated region
        $region73: #{convnext_with_cellcount_forward.1} parent=63 // pred_check
          %p485 = pneg %p484
        $region74: #{convnext_with_cellcount_forward.1} parent=63 // pred_check_branch
          %487 = sbr.rel (%p485) target = $region76
        $region75: #{convnext_with_cellcount_forward.1} parent=63 // pred_region
          %v488 = vld [vmem:[#allocation2] sm:$0xff]
          %v489 = vmul.f32 %v488, 0.0625
          %v490 = vpack.c.bf16 %v489, %v489
          %v491 = vld [vmem:[%s1] sm:$0xff]
          %v492 = vld [vmem:[%s1 + $0x8] sm:$0xff]
          %v493 = vld [vmem:[%s1 + $0x10] sm:$0xff]
          %v494 = vld [vmem:[%s1 + $0x18] sm:$0xff]
          %v495 = vld [vmem:[%s1 + $0x20] sm:$0xff]
          %v496 = vld [vmem:[%s1 + $0x28] sm:$0xff]
          %v497 = vld [vmem:[%s1 + $0x30] sm:$0xff]
          %v498 = vld [vmem:[%s1 + $0x38] sm:$0xff]
          %v499 = vld [vmem:[%s1 + $0x40] sm:$0xff]
          %v500 = vld [vmem:[%s1 + $0x48] sm:$0xff]
          %v501 = vld [vmem:[%s1 + $0x50] sm:$0xff]
          %v502 = vld [vmem:[%s1 + $0x58] sm:$0xff]
          %v503 = vld [vmem:[%s1 + $0x60] sm:$0xff]
          %v504 = vld [vmem:[%s1 + $0x68] sm:$0xff]
          %v505 = vld [vmem:[%s1 + $0x70] sm:$0xff]
          %v506 = vld [vmem:[%s1 + $0x78] sm:$0xff]
          %v507 = vld [vmem:[%s1 + $0x80] sm:$0xff]
          %v508 = vld [vmem:[%s1 + $0x88] sm:$0xff]
          %v509 = vld [vmem:[%s2] sm:$0x3f]
          %v511 = vlaneseq
          %v512 = vshrl.u32 %v511, 7
          %v513 = vsub.s32 0, %v512
          %v514 = vrot.slane %v509, %v513
          %v515 = vlaneseq
          %v516 = vshrl.u32 %v515, 7
          %v517 = vsub.s32 1, %v516
          %v518 = vrot.slane %v509, %v517
          %v519 = vlaneseq
          %v520 = vshrl.u32 %v519, 7
          %v521 = vsub.s32 2, %v520
          %v522 = vrot.slane %v509, %v521
          %v523 = vlaneseq
          %v524 = vshrl.u32 %v523, 7
          %v525 = vsub.s32 3, %v524
          %v526 = vrot.slane %v509, %v525
          %v527 = vlaneseq
          %v528 = vshrl.u32 %v527, 7
          %v529 = vsub.s32 4, %v528
          %v530 = vrot.slane %v509, %v529
          %v531 = vlaneseq
          %v532 = vshrl.u32 %v531, 7
          %v533 = vsub.s32 5, %v532
          %v534 = vrot.slane %v509, %v533
          %v559 = vunpack.c.l.b16 %v491
          %v560 = vunpack.c.h.b16 %v491
          %v561 = vunpack.c.l.b16 %v492
          %v562 = vunpack.c.h.b16 %v492
          %v563 = vunpack.c.l.b16 %v493
          %v564 = vunpack.c.h.b16 %v493
          %v565 = vunpack.c.l.b16 %v494
          %v566 = vunpack.c.h.b16 %v494
          %v567 = vunpack.c.l.b16 %v495
          %v568 = vunpack.c.h.b16 %v495
          %v569 = vunpack.c.l.b16 %v496
          %v570 = vunpack.c.h.b16 %v496
          %v571 = vunpack.c.l.b16 %v497
          %v572 = vunpack.c.h.b16 %v497
          %v573 = vunpack.c.l.b16 %v498
          %v574 = vunpack.c.h.b16 %v498
          %v575 = vunpack.c.l.b16 %v499
          %v576 = vunpack.c.h.b16 %v499
          %v577 = vunpack.c.l.b16 %v500
          %v578 = vunpack.c.h.b16 %v500
          %v579 = vunpack.c.l.b16 %v501
          %v580 = vunpack.c.h.b16 %v501
          %v581 = vunpack.c.l.b16 %v502
          %v582 = vunpack.c.h.b16 %v502
          %v583 = vunpack.c.l.b16 %v503
          %v584 = vunpack.c.h.b16 %v503
          %v585 = vunpack.c.l.b16 %v504
          %v586 = vunpack.c.h.b16 %v504
          %v587 = vunpack.c.l.b16 %v505
          %v588 = vunpack.c.h.b16 %v505
          %v589 = vunpack.c.l.b16 %v506
          %v590 = vunpack.c.h.b16 %v506
          %v591 = vunpack.c.l.b16 %v507
          %v592 = vunpack.c.h.b16 %v507
          %v593 = vunpack.c.l.b16 %v508
          %v594 = vunpack.c.h.b16 %v508
          %v595 = vpack.c.b16 %v565, %v559
          %v596 = vpack.c.b16 %v566, %v560
          %v597 = vpack.c.b16 %v567, %v561
          %v598 = vpack.c.b16 %v568, %v562
          %v599 = vpack.c.b16 %v569, %v563
          %v600 = vpack.c.b16 %v570, %v564
          %v601 = vpack.c.b16 %v577, %v571
          %v602 = vpack.c.b16 %v578, %v572
          %v603 = vpack.c.b16 %v579, %v573
          %v604 = vpack.c.b16 %v580, %v574
          %v605 = vpack.c.b16 %v581, %v575
          %v606 = vpack.c.b16 %v582, %v576
          %v607 = vpack.c.b16 %v589, %v583
          %v608 = vpack.c.b16 %v590, %v584
          %v609 = vpack.c.b16 %v591, %v585
          %v610 = vpack.c.b16 %v592, %v586
          %v611 = vpack.c.b16 %v593, %v587
          %v612 = vpack.c.b16 %v594, %v588
          %v632 = vsel %vm466, %v490, 0
          %634 = vmatprep.subr.bf16.mxu0 %v596
          %635 = vmatpush1.bf16.msra.mxu0 %v595
          %636 = vmatprep.subr.bf16.mxu0 %v602
          %637 = vmatpush1.bf16.msra.mxu0 %v601
          %638 = vmatprep.subr.bf16.mxu0 %v608
          %639 = vmatpush1.bf16.msra.mxu0 %v607
          %640 = vmatprep.subr.bf16.mxu0 0
          %641 = vmatpush1.bf16.msra.mxu0 0
          %642 = vmatprep.subr.bf16.mxu0 0
          %643 = vmatpush1.bf16.msra.mxu0 0
          %644 = vmatprep.subr.bf16.mxu0 0
          %645 = vmatpush1.bf16.msra.mxu0 0
          %646 = vmatprep.subr.bf16.mxu0 0
          %647 = vmatpush1.bf16.msra.mxu0 0
          %648 = vmatprep.subr.bf16.mxu0 0
          %649 = vmatpush1.bf16.msra.mxu0 0
          %650 = vmatprep.subr.bf16.mxu0 0
          %651 = vmatpush1.bf16.msra.mxu0 0
          %652 = vmatprep.subr.bf16.mxu0 0
          %653 = vmatpush1.bf16.msra.mxu0 0
          %654 = vmatprep.subr.bf16.mxu0 0
          %655 = vmatpush1.bf16.msra.mxu0 0
          %656 = vmatprep.subr.bf16.mxu0 0
          %657 = vmatpush1.bf16.msra.mxu0 0
          %658 = vmatprep.subr.bf16.mxu0 0
          %659 = vmatpush1.bf16.msra.mxu0 0
          %660 = vmatprep.subr.bf16.mxu0 0
          %661 = vmatpush1.bf16.msra.mxu0 0
          %662 = vmatprep.subr.bf16.mxu0 0
          %663 = vmatpush1.bf16.msra.mxu0 0
          %664 = vmatprep.subr.bf16.mxu0 0
          %665 = vmatpush1.bf16.msra.mxu0 0
          %666 = vmatprep.mubr.bf16.mxu0 0
          %667 = vmatmul.mubr.bf16.gmra.mrb[0].mxu0 %v632
          %v668 = vpop.f32.mrb[0].mxu0
          %v669 = vadd.f32 %v514, %v668
          %v670 = vpop.f32.mrb[0].mxu0
          %v671 = vadd.f32 %v518, %v670
          %v672 = vpop.f32.mrb[0].mxu0
          %v673 = vpop.f32.mrb[0].mxu0
          %674 = vdwg.mxu0
          %675 = vmatprep.subr.bf16.mxu0 %v598
          %676 = vmatpush1.bf16.msra.mxu0 %v597
          %677 = vmatprep.subr.bf16.mxu0 %v604
          %678 = vmatpush1.bf16.msra.mxu0 %v603
          %679 = vmatprep.subr.bf16.mxu0 %v610
          %680 = vmatpush1.bf16.msra.mxu0 %v609
          %681 = vmatprep.subr.bf16.mxu0 0
          %682 = vmatpush1.bf16.msra.mxu0 0
          %683 = vmatprep.subr.bf16.mxu0 0
          %684 = vmatpush1.bf16.msra.mxu0 0
          %685 = vmatprep.subr.bf16.mxu0 0
          %686 = vmatpush1.bf16.msra.mxu0 0
          %687 = vmatprep.subr.bf16.mxu0 0
          %688 = vmatpush1.bf16.msra.mxu0 0
          %689 = vmatprep.subr.bf16.mxu0 0
          %690 = vmatpush1.bf16.msra.mxu0 0
          %691 = vmatprep.subr.bf16.mxu0 0
          %692 = vmatpush1.bf16.msra.mxu0 0
          %693 = vmatprep.subr.bf16.mxu0 0
          %694 = vmatpush1.bf16.msra.mxu0 0
          %695 = vmatprep.subr.bf16.mxu0 0
          %696 = vmatpush1.bf16.msra.mxu0 0
          %697 = vmatprep.subr.bf16.mxu0 0
          %698 = vmatpush1.bf16.msra.mxu0 0
          %699 = vmatprep.subr.bf16.mxu0 0
          %700 = vmatpush1.bf16.msra.mxu0 0
          %701 = vmatprep.subr.bf16.mxu0 0
          %702 = vmatpush1.bf16.msra.mxu0 0
          %703 = vmatprep.subr.bf16.mxu0 0
          %704 = vmatpush1.bf16.msra.mxu0 0
          %705 = vmatprep.subr.bf16.mxu0 0
          %706 = vmatpush1.bf16.msra.mxu0 0
          %707 = vmatprep.mubr.bf16.mxu0 0
          %708 = vmatmul.mubr.bf16.gmra.mrb[0].mxu0 %v632
          %v709 = vpop.f32.mrb[0].mxu0
          %v710 = vadd.f32 %v522, %v709
          %v711 = vpop.f32.mrb[0].mxu0
          %v712 = vadd.f32 %v526, %v711
          %v713 = vpop.f32.mrb[0].mxu0
          %v714 = vpop.f32.mrb[0].mxu0
          %715 = vdwg.mxu0
          %716 = vmatprep.subr.bf16.mxu0 %v600
          %717 = vmatpush1.bf16.msra.mxu0 %v599
          %718 = vmatprep.subr.bf16.mxu0 %v606
          %719 = vmatpush1.bf16.msra.mxu0 %v605
          %720 = vmatprep.subr.bf16.mxu0 %v612
          %721 = vmatpush1.bf16.msra.mxu0 %v611
          %722 = vmatprep.subr.bf16.mxu0 0
          %723 = vmatpush1.bf16.msra.mxu0 0
          %724 = vmatprep.subr.bf16.mxu0 0
          %725 = vmatpush1.bf16.msra.mxu0 0
          %726 = vmatprep.subr.bf16.mxu0 0
          %727 = vmatpush1.bf16.msra.mxu0 0
          %728 = vmatprep.subr.bf16.mxu0 0
          %729 = vmatpush1.bf16.msra.mxu0 0
          %730 = vmatprep.subr.bf16.mxu0 0
          %731 = vmatpush1.bf16.msra.mxu0 0
          %732 = vmatprep.subr.bf16.mxu0 0
          %733 = vmatpush1.bf16.msra.mxu0 0
          %734 = vmatprep.subr.bf16.mxu0 0
          %735 = vmatpush1.bf16.msra.mxu0 0
          %736 = vmatprep.subr.bf16.mxu0 0
          %737 = vmatpush1.bf16.msra.mxu0 0
          %738 = vmatprep.subr.bf16.mxu0 0
          %739 = vmatpush1.bf16.msra.mxu0 0
          %740 = vmatprep.subr.bf16.mxu0 0
          %741 = vmatpush1.bf16.msra.mxu0 0
          %742 = vmatprep.subr.bf16.mxu0 0
          %743 = vmatpush1.bf16.msra.mxu0 0
          %744 = vmatprep.subr.bf16.mxu0 0
          %745 = vmatpush1.bf16.msra.mxu0 0
          %746 = vmatprep.subr.bf16.mxu0 0
          %747 = vmatpush1.bf16.msra.mxu0 0
          %748 = vmatprep.mubr.bf16.mxu0 0
          %749 = vmatmul.mubr.bf16.gmra.mrb[0].mxu0 %v632
          %v750 = vpop.f32.mrb[0].mxu0
          %v751 = vadd.f32 %v530, %v750
          %v752 = vpop.f32.mrb[0].mxu0
          %v753 = vadd.f32 %v534, %v752
          %v754 = vpop.f32.mrb[0].mxu0
          %v755 = vpop.f32.mrb[0].mxu0
          %756 = vdwg.mxu0
          %v757 = vadd.f32 %v669, %v671
          %v758 = vadd.f32 %v757, %v710
          %v759 = vadd.f32 %v758, %v712
          %v760 = vadd.f32 %v759, %v751
          %v761 = vadd.f32 %v760, %v753
          %762 = vadd.xlane.f32.xlu0 %v761
          %v763 = vpop.xlane.xlu0 %762
          %v764 = vrcp.pop 768.0
          %v765 = vmul.f32 %v763, %v764
          %v766 = vsub.f32 %v669, %v765
          %v767 = vsub.f32 %v671, %v765
          %v768 = vsub.f32 %v710, %v765
          %v769 = vsub.f32 %v712, %v765
          %v770 = vsub.f32 %v751, %v765
          %v771 = vsub.f32 %v753, %v765
          %v772 = vmul.f32 %v766, %v766
          %v773 = vmul.f32 %v767, %v767
          %v774 = vmul.f32 %v768, %v768
          %v775 = vmul.f32 %v769, %v769
          %v776 = vmul.f32 %v770, %v770
          %v777 = vmul.f32 %v771, %v771
          %v778 = vadd.f32 %v772, %v773
          %v779 = vadd.f32 %v778, %v774
          %v780 = vadd.f32 %v779, %v775
          %v781 = vadd.f32 %v780, %v776
          %v782 = vadd.f32 %v781, %v777
          %783 = vadd.xlane.f32.xlu0 %v782
          %v784 = vpop.xlane.xlu0 %783
          %v785 = vmul.f32 %v784, %v764
          %v786 = vadd.f32 %v785, 1e-06
          %v787 = vrsqrt.pop %v786
          %v788 = vmul.f32 %v766, %v787
          %v789 = vmul.f32 %v767, %v787
          %v790 = vmul.f32 %v768, %v787
          %v791 = vmul.f32 %v769, %v787
          %v792 = vmul.f32 %v770, %v787
          %v793 = vmul.f32 %v771, %v787
          %v794 = vld [vmem:[%s4] sm:$0x3f]
          %v796 = vlaneseq
          %v797 = vshrl.u32 %v796, 7
          %v798 = vsub.s32 0, %v797
          %v799 = vrot.slane %v794, %v798
          %v800 = vlaneseq
          %v801 = vshrl.u32 %v800, 7
          %v802 = vsub.s32 1, %v801
          %v803 = vrot.slane %v794, %v802
          %v804 = vlaneseq
          %v805 = vshrl.u32 %v804, 7
          %v806 = vsub.s32 2, %v805
          %v807 = vrot.slane %v794, %v806
          %v808 = vlaneseq
          %v809 = vshrl.u32 %v808, 7
          %v810 = vsub.s32 3, %v809
          %v811 = vrot.slane %v794, %v810
          %v812 = vlaneseq
          %v813 = vshrl.u32 %v812, 7
          %v814 = vsub.s32 4, %v813
          %v815 = vrot.slane %v794, %v814
          %v816 = vlaneseq
          %v817 = vshrl.u32 %v816, 7
          %v818 = vsub.s32 5, %v817
          %v819 = vrot.slane %v794, %v818
          %v826 = vmul.f32 %v788, %v799
          %v827 = vmul.f32 %v789, %v803
          %v828 = vmul.f32 %v790, %v807
          %v829 = vmul.f32 %v791, %v811
          %v830 = vmul.f32 %v792, %v815
          %v831 = vmul.f32 %v793, %v819
          %v832 = vld [vmem:[%s5] sm:$0x3f]
          %v834 = vlaneseq
          %v835 = vshrl.u32 %v834, 7
          %v836 = vsub.s32 0, %v835
          %v837 = vrot.slane %v832, %v836
          %v838 = vlaneseq
          %v839 = vshrl.u32 %v838, 7
          %v840 = vsub.s32 1, %v839
          %v841 = vrot.slane %v832, %v840
          %v842 = vlaneseq
          %v843 = vshrl.u32 %v842, 7
          %v844 = vsub.s32 2, %v843
          %v845 = vrot.slane %v832, %v844
          %v846 = vlaneseq
          %v847 = vshrl.u32 %v846, 7
          %v848 = vsub.s32 3, %v847
          %v849 = vrot.slane %v832, %v848
          %v850 = vlaneseq
          %v851 = vshrl.u32 %v850, 7
          %v852 = vsub.s32 4, %v851
          %v853 = vrot.slane %v832, %v852
          %v854 = vlaneseq
          %v855 = vshrl.u32 %v854, 7
          %v856 = vsub.s32 5, %v855
          %v857 = vrot.slane %v832, %v856
          %v864 = vadd.f32 %v826, %v837
          %v865 = vadd.f32 %v827, %v841
          %v866 = vadd.f32 %v828, %v845
          %v867 = vadd.f32 %v829, %v849
          %v868 = vadd.f32 %v830, %v853
          %v869 = vadd.f32 %v831, %v857
          %v870 = vpack.c.bf16 %v864, %v864
          %v871 = vpack.c.bf16 %v865, %v865
          %v872 = vpack.c.bf16 %v866, %v866
          %v873 = vpack.c.bf16 %v867, %v867
          %v874 = vpack.c.bf16 %v868, %v868
          %v875 = vpack.c.bf16 %v869, %v869
          %v876 = vld [vmem:[#allocation3] sm:$0xff]
          %v877 = vld [vmem:[#allocation3 + $0x8] sm:$0xff]
          %v878 = vld [vmem:[#allocation3 + $0x10] sm:$0xff]
          %v879 = vld [vmem:[#allocation3 + $0x18] sm:$0xff]
          %v880 = vld [vmem:[#allocation3 + $0x20] sm:$0xff]
          %v881 = vld [vmem:[#allocation3 + $0x28] sm:$0xff]
          %v882 = vld [vmem:[#allocation3 + $0x30] sm:$0xff]
          %v883 = vld [vmem:[#allocation3 + $0x38] sm:$0xff]
          %v884 = vld [vmem:[#allocation3 + $0x40] sm:$0xff]
          %v885 = vld [vmem:[#allocation3 + $0x48] sm:$0xff]
          %v886 = vld [vmem:[#allocation3 + $0x50] sm:$0xff]
          %v887 = vld [vmem:[#allocation3 + $0x58] sm:$0xff]
          %v888 = vld [vmem:[#allocation3 + $0x60] sm:$0xff]
          %v889 = vld [vmem:[#allocation3 + $0x68] sm:$0xff]
          %v890 = vld [vmem:[#allocation3 + $0x70] sm:$0xff]
          %v891 = vld [vmem:[#allocation3 + $0x78] sm:$0xff]
          %v892 = vld [vmem:[#allocation3 + $0x80] sm:$0xff]
          %v893 = vld [vmem:[#allocation3 + $0x88] sm:$0xff]
          %v894 = vld [vmem:[#allocation3 + $0x90] sm:$0xff]
          %v895 = vld [vmem:[#allocation3 + $0x98] sm:$0xff]
          %v896 = vld [vmem:[#allocation3 + $0xa0] sm:$0xff]
          %v897 = vld [vmem:[#allocation3 + $0xa8] sm:$0xff]
          %v898 = vld [vmem:[#allocation3 + $0xb0] sm:$0xff]
          %v899 = vld [vmem:[#allocation3 + $0xb8] sm:$0xff]
          %v900 = vld [vmem:[#allocation3 + $0xc0] sm:$0xff]
          %v901 = vld [vmem:[#allocation3 + $0xc8] sm:$0xff]
          %v902 = vld [vmem:[#allocation3 + $0xd0] sm:$0xff]
          %v903 = vld [vmem:[#allocation3 + $0xd8] sm:$0xff]
          %v904 = vld [vmem:[#allocation3 + $0xe0] sm:$0xff]
          %v905 = vld [vmem:[#allocation3 + $0xe8] sm:$0xff]
          %v906 = vld [vmem:[#allocation3 + $0xf0] sm:$0xff]
          %v907 = vld [vmem:[#allocation3 + $0xf8] sm:$0xff]
          %v908 = vld [vmem:[#allocation3 + $0x100] sm:$0xff]
          %v909 = vld [vmem:[#allocation3 + $0x108] sm:$0xff]
          %v910 = vld [vmem:[#allocation3 + $0x110] sm:$0xff]
          %v911 = vld [vmem:[#allocation3 + $0x118] sm:$0xff]
          %v912 = vld [vmem:[#allocation3 + $0x120] sm:$0xff]
          %v913 = vld [vmem:[#allocation3 + $0x128] sm:$0xff]
          %v914 = vld [vmem:[#allocation3 + $0x130] sm:$0xff]
          %v915 = vld [vmem:[#allocation3 + $0x138] sm:$0xff]
          %v916 = vld [vmem:[#allocation3 + $0x140] sm:$0xff]
          %v917 = vld [vmem:[#allocation3 + $0x148] sm:$0xff]
          %v918 = vld [vmem:[#allocation3 + $0x150] sm:$0xff]
          %v919 = vld [vmem:[#allocation3 + $0x158] sm:$0xff]
          %v920 = vld [vmem:[#allocation3 + $0x160] sm:$0xff]
          %v921 = vld [vmem:[#allocation3 + $0x168] sm:$0xff]
          %v922 = vld [vmem:[#allocation3 + $0x170] sm:$0xff]
          %v923 = vld [vmem:[#allocation3 + $0x178] sm:$0xff]
          %v924 = vld [vmem:[#allocation3 + $0x180] sm:$0xff]
          %v925 = vld [vmem:[#allocation3 + $0x188] sm:$0xff]
          %v926 = vld [vmem:[#allocation3 + $0x190] sm:$0xff]
          %v927 = vld [vmem:[#allocation3 + $0x198] sm:$0xff]
          %v928 = vld [vmem:[#allocation3 + $0x1a0] sm:$0xff]
          %v929 = vld [vmem:[#allocation3 + $0x1a8] sm:$0xff]
          %v930 = vld [vmem:[#allocation3 + $0x1b0] sm:$0xff]
          %v931 = vld [vmem:[#allocation3 + $0x1b8] sm:$0xff]
          %v932 = vld [vmem:[#allocation3 + $0x1c0] sm:$0xff]
          %v933 = vld [vmem:[#allocation3 + $0x1c8] sm:$0xff]
          %v934 = vld [vmem:[#allocation3 + $0x1d0] sm:$0xff]
          %v935 = vld [vmem:[#allocation3 + $0x1d8] sm:$0xff]
          %v936 = vld [vmem:[#allocation3 + $0x1e0] sm:$0xff]
          %v937 = vld [vmem:[#allocation3 + $0x1e8] sm:$0xff]
          %v938 = vld [vmem:[#allocation3 + $0x1f0] sm:$0xff]
          %v939 = vld [vmem:[#allocation3 + $0x1f8] sm:$0xff]
          %v940 = vld [vmem:[#allocation3 + $0x200] sm:$0xff]
          %v941 = vld [vmem:[#allocation3 + $0x208] sm:$0xff]
          %v942 = vld [vmem:[#allocation3 + $0x210] sm:$0xff]
          %v943 = vld [vmem:[#allocation3 + $0x218] sm:$0xff]
          %v944 = vld [vmem:[#allocation3 + $0x220] sm:$0xff]
          %v945 = vld [vmem:[#allocation3 + $0x228] sm:$0xff]
          %v946 = vld [vmem:[#allocation3 + $0x230] sm:$0xff]
          %v947 = vld [vmem:[#allocation3 + $0x238] sm:$0xff]
          %v948 = vld [vmem:[#allocation3 + $0x240] sm:$0xff]
          %v949 = vld [vmem:[#allocation3 + $0x248] sm:$0xff]
          %v950 = vld [vmem:[#allocation3 + $0x250] sm:$0xff]
          %v951 = vld [vmem:[#allocation3 + $0x258] sm:$0xff]
          %v952 = vld [vmem:[#allocation3 + $0x260] sm:$0xff]
          %v953 = vld [vmem:[#allocation3 + $0x268] sm:$0xff]
          %v954 = vld [vmem:[#allocation3 + $0x270] sm:$0xff]
          %v955 = vld [vmem:[#allocation3 + $0x278] sm:$0xff]
          %v956 = vld [vmem:[#allocation3 + $0x280] sm:$0xff]
          %v957 = vld [vmem:[#allocation3 + $0x288] sm:$0xff]
          %v958 = vld [vmem:[#allocation3 + $0x290] sm:$0xff]
          %v959 = vld [vmem:[#allocation3 + $0x298] sm:$0xff]
          %v960 = vld [vmem:[#allocation3 + $0x2a0] sm:$0xff]
          %v961 = vld [vmem:[#allocation3 + $0x2a8] sm:$0xff]
          %v962 = vld [vmem:[#allocation3 + $0x2b0] sm:$0xff]
          %v963 = vld [vmem:[#allocation3 + $0x2b8] sm:$0xff]
          %v964 = vld [vmem:[#allocation3 + $0x2c0] sm:$0xff]
          %v965 = vld [vmem:[#allocation3 + $0x2c8] sm:$0xff]
          %v966 = vld [vmem:[#allocation3 + $0x2d0] sm:$0xff]
          %v967 = vld [vmem:[#allocation3 + $0x2d8] sm:$0xff]
          %v968 = vld [vmem:[#allocation3 + $0x2e0] sm:$0xff]
          %v969 = vld [vmem:[#allocation3 + $0x2e8] sm:$0xff]
          %v970 = vld [vmem:[#allocation3 + $0x2f0] sm:$0xff]
          %v971 = vld [vmem:[#allocation3 + $0x2f8] sm:$0xff]
          %v972 = vld [vmem:[#allocation3 + $0x300] sm:$0xff]
          %v973 = vld [vmem:[#allocation3 + $0x308] sm:$0xff]
          %v974 = vld [vmem:[#allocation3 + $0x310] sm:$0xff]
          %v975 = vld [vmem:[#allocation3 + $0x318] sm:$0xff]
          %v976 = vld [vmem:[#allocation3 + $0x320] sm:$0xff]
          %v977 = vld [vmem:[#allocation3 + $0x328] sm:$0xff]
          %v978 = vld [vmem:[#allocation3 + $0x330] sm:$0xff]
          %v979 = vld [vmem:[#allocation3 + $0x338] sm:$0xff]
          %v980 = vld [vmem:[#allocation3 + $0x340] sm:$0xff]
          %v981 = vld [vmem:[#allocation3 + $0x348] sm:$0xff]
          %v982 = vld [vmem:[#allocation3 + $0x350] sm:$0xff]
          %v983 = vld [vmem:[#allocation3 + $0x358] sm:$0xff]
          %v984 = vld [vmem:[#allocation3 + $0x360] sm:$0xff]
          %v985 = vld [vmem:[#allocation3 + $0x368] sm:$0xff]
          %v986 = vld [vmem:[#allocation3 + $0x370] sm:$0xff]
          %v987 = vld [vmem:[#allocation3 + $0x378] sm:$0xff]
          %v988 = vld [vmem:[#allocation3 + $0x380] sm:$0xff]
          %v989 = vld [vmem:[#allocation3 + $0x388] sm:$0xff]
          %v990 = vld [vmem:[#allocation3 + $0x390] sm:$0xff]
          %v991 = vld [vmem:[#allocation3 + $0x398] sm:$0xff]
          %v992 = vld [vmem:[#allocation3 + $0x3a0] sm:$0xff]
          %v993 = vld [vmem:[#allocation3 + $0x3a8] sm:$0xff]
          %v994 = vld [vmem:[#allocation3 + $0x3b0] sm:$0xff]
          %v995 = vld [vmem:[#allocation3 + $0x3b8] sm:$0xff]
          %v996 = vld [vmem:[#allocation3 + $0x3c0] sm:$0xff]
          %v997 = vld [vmem:[#allocation3 + $0x3c8] sm:$0xff]
          %v998 = vld [vmem:[#allocation3 + $0x3d0] sm:$0xff]
          %v999 = vld [vmem:[#allocation3 + $0x3d8] sm:$0xff]
          %v1000 = vld [vmem:[#allocation3 + $0x3e0] sm:$0xff]
          %v1001 = vld [vmem:[#allocation3 + $0x3e8] sm:$0xff]
          %v1002 = vld [vmem:[#allocation3 + $0x3f0] sm:$0xff]
          %v1003 = vld [vmem:[#allocation3 + $0x3f8] sm:$0xff]
          %v1004 = vld [vmem:[#allocation3 + $0x400] sm:$0xff]
          %v1005 = vld [vmem:[#allocation3 + $0x408] sm:$0xff]
          %v1006 = vld [vmem:[#allocation3 + $0x410] sm:$0xff]
          %v1007 = vld [vmem:[#allocation3 + $0x418] sm:$0xff]
          %v1008 = vld [vmem:[#allocation3 + $0x420] sm:$0xff]
          %v1009 = vld [vmem:[#allocation3 + $0x428] sm:$0xff]
          %v1010 = vld [vmem:[#allocation3 + $0x430] sm:$0xff]
          %v1011 = vld [vmem:[#allocation3 + $0x438] sm:$0xff]
          %v1012 = vld [vmem:[#allocation3 + $0x440] sm:$0xff]
          %v1013 = vld [vmem:[#allocation3 + $0x448] sm:$0xff]
          %v1014 = vld [vmem:[#allocation3 + $0x450] sm:$0xff]
          %v1015 = vld [vmem:[#allocation3 + $0x458] sm:$0xff]
          %v1016 = vld [vmem:[#allocation3 + $0x460] sm:$0xff]
          %v1017 = vld [vmem:[#allocation3 + $0x468] sm:$0xff]
          %v1018 = vld [vmem:[#allocation3 + $0x470] sm:$0xff]
          %v1019 = vld [vmem:[#allocation3 + $0x478] sm:$0xff]
          %v1020 = vld [vmem:[#allocation3 + $0x480] sm:$0xff]
          %v1021 = vld [vmem:[#allocation3 + $0x488] sm:$0xff]
          %v1022 = vld [vmem:[#allocation3 + $0x490] sm:$0xff]
          %v1023 = vld [vmem:[#allocation3 + $0x498] sm:$0xff]
          %v1024 = vld [vmem:[#allocation3 + $0x4a0] sm:$0xff]
          %v1025 = vld [vmem:[#allocation3 + $0x4a8] sm:$0xff]
          %v1026 = vld [vmem:[#allocation3 + $0x4b0] sm:$0xff]
          %v1027 = vld [vmem:[#allocation3 + $0x4b8] sm:$0xff]
          %v1028 = vld [vmem:[#allocation3 + $0x4c0] sm:$0xff]
          %v1029 = vld [vmem:[#allocation3 + $0x4c8] sm:$0xff]
          %v1030 = vld [vmem:[#allocation3 + $0x4d0] sm:$0xff]
          %v1031 = vld [vmem:[#allocation3 + $0x4d8] sm:$0xff]
          %v1032 = vld [vmem:[#allocation3 + $0x4e0] sm:$0xff]
          %v1033 = vld [vmem:[#allocation3 + $0x4e8] sm:$0xff]
          %v1034 = vld [vmem:[#allocation3 + $0x4f0] sm:$0xff]
          %v1035 = vld [vmem:[#allocation3 + $0x4f8] sm:$0xff]
          %v1036 = vld [vmem:[#allocation3 + $0x500] sm:$0xff]
          %v1037 = vld [vmem:[#allocation3 + $0x508] sm:$0xff]
          %v1038 = vld [vmem:[#allocation3 + $0x510] sm:$0xff]
          %v1039 = vld [vmem:[#allocation3 + $0x518] sm:$0xff]
          %v1040 = vld [vmem:[#allocation3 + $0x520] sm:$0xff]
          %v1041 = vld [vmem:[#allocation3 + $0x528] sm:$0xff]
          %v1042 = vld [vmem:[#allocation3 + $0x530] sm:$0xff]
          %v1043 = vld [vmem:[#allocation3 + $0x538] sm:$0xff]
          %v1044 = vld [vmem:[#allocation3 + $0x540] sm:$0xff]
          %v1045 = vld [vmem:[#allocation3 + $0x548] sm:$0xff]
          %v1046 = vld [vmem:[#allocation3 + $0x550] sm:$0xff]
          %v1047 = vld [vmem:[#allocation3 + $0x558] sm:$0xff]
          %v1048 = vld [vmem:[#allocation3 + $0x560] sm:$0xff]
          %v1049 = vld [vmem:[#allocation3 + $0x568] sm:$0xff]
          %v1050 = vld [vmem:[#allocation3 + $0x570] sm:$0xff]
          %v1051 = vld [vmem:[#allocation3 + $0x578] sm:$0xff]
          %v1052 = vld [vmem:[#allocation3 + $0x580] sm:$0xff]
          %v1053 = vld [vmem:[#allocation3 + $0x588] sm:$0xff]
          %v1054 = vld [vmem:[#allocation3 + $0x590] sm:$0xff]
          %v1055 = vld [vmem:[#allocation3 + $0x598] sm:$0xff]
          %v1056 = vld [vmem:[#allocation3 + $0x5a0] sm:$0xff]
          %v1057 = vld [vmem:[#allocation3 + $0x5a8] sm:$0xff]
          %v1058 = vld [vmem:[#allocation3 + $0x5b0] sm:$0xff]
          %v1059 = vld [vmem:[#allocation3 + $0x5b8] sm:$0xff]
          %v1060 = vld [vmem:[#allocation3 + $0x5c0] sm:$0xff]
          %v1061 = vld [vmem:[#allocation3 + $0x5c8] sm:$0xff]
          %v1062 = vld [vmem:[#allocation3 + $0x5d0] sm:$0xff]
          %v1063 = vld [vmem:[#allocation3 + $0x5d8] sm:$0xff]
          %v1064 = vld [vmem:[#allocation3 + $0x5e0] sm:$0xff]
          %v1065 = vld [vmem:[#allocation3 + $0x5e8] sm:$0xff]
          %v1066 = vld [vmem:[#allocation3 + $0x5f0] sm:$0xff]
          %v1067 = vld [vmem:[#allocation3 + $0x5f8] sm:$0xff]
          %v1068 = vld [vmem:[%s437] sm:$0xff]
          %v1069 = vld [vmem:[%s7] sm:$0xf]
          %1071 = vset.pattern.permute.xlu0 0
          %1072 = vperm.xlu0 %1071, %v1068
          %v1073 = vpop.permute.xlu0 %1072
          %v1076 = vlaneseq
          %v1077 = vshrl.u32 %v1076, 7
          %v1078 = vsub.s32 0, %v1077
          %v1079 = vrot.slane %v1069, %v1078
          %v1080 = vlaneseq
          %v1081 = vshrl.u32 %v1080, 7
          %v1082 = vsub.s32 1, %v1081
          %v1083 = vrot.slane %v1069, %v1082
          %v1084 = vlaneseq
          %v1085 = vshrl.u32 %v1084, 7
          %v1086 = vsub.s32 2, %v1085
          %v1087 = vrot.slane %v1069, %v1086
          %v1088 = vlaneseq
          %v1089 = vshrl.u32 %v1088, 7
          %v1090 = vsub.s32 3, %v1089
          %v1091 = vrot.slane %v1069, %v1090
          %v1096 = vmul.f32 %v1073, %v1079
          %v1097 = vmul.f32 %v1073, %v1083
          %v1098 = vmul.f32 %v1073, %v1087
          %v1099 = vmul.f32 %v1073, %v1091
          %v1292 = vunpack.c.l.b16 %v876
          %v1293 = vunpack.c.h.b16 %v876
          %v1294 = vunpack.c.l.b16 %v877
          %v1295 = vunpack.c.h.b16 %v877
          %v1296 = vunpack.c.l.b16 %v878
          %v1297 = vunpack.c.h.b16 %v878
          %v1298 = vunpack.c.l.b16 %v879
          %v1299 = vunpack.c.h.b16 %v879
          %v1300 = vunpack.c.l.b16 %v880
          %v1301 = vunpack.c.h.b16 %v880
          %v1302 = vunpack.c.l.b16 %v881
          %v1303 = vunpack.c.h.b16 %v881
          %v1304 = vunpack.c.l.b16 %v882
          %v1305 = vunpack.c.h.b16 %v882
          %v1306 = vunpack.c.l.b16 %v883
          %v1307 = vunpack.c.h.b16 %v883
          %v1308 = vunpack.c.l.b16 %v884
          %v1309 = vunpack.c.h.b16 %v884
          %v1310 = vunpack.c.l.b16 %v885
          %v1311 = vunpack.c.h.b16 %v885
          %v1312 = vunpack.c.l.b16 %v886
          %v1313 = vunpack.c.h.b16 %v886
          %v1314 = vunpack.c.l.b16 %v887
          %v1315 = vunpack.c.h.b16 %v887
          %v1316 = vunpack.c.l.b16 %v888
          %v1317 = vunpack.c.h.b16 %v888
          %v1318 = vunpack.c.l.b16 %v889
          %v1319 = vunpack.c.h.b16 %v889
          %v1320 = vunpack.c.l.b16 %v890
          %v1321 = vunpack.c.h.b16 %v890
          %v1322 = vunpack.c.l.b16 %v891
          %v1323 = vunpack.c.h.b16 %v891
          %v1324 = vunpack.c.l.b16 %v892
          %v1325 = vunpack.c.h.b16 %v892
          %v1326 = vunpack.c.l.b16 %v893
          %v1327 = vunpack.c.h.b16 %v893
          %v1328 = vunpack.c.l.b16 %v894
          %v1329 = vunpack.c.h.b16 %v894
          %v1330 = vunpack.c.l.b16 %v895
          %v1331 = vunpack.c.h.b16 %v895
          %v1332 = vunpack.c.l.b16 %v896
          %v1333 = vunpack.c.h.b16 %v896
          %v1334 = vunpack.c.l.b16 %v897
          %v1335 = vunpack.c.h.b16 %v897
          %v1336 = vunpack.c.l.b16 %v898
          %v1337 = vunpack.c.h.b16 %v898
          %v1338 = vunpack.c.l.b16 %v899
          %v1339 = vunpack.c.h.b16 %v899
          %v1340 = vunpack.c.l.b16 %v900
          %v1341 = vunpack.c.h.b16 %v900
          %v1342 = vunpack.c.l.b16 %v901
          %v1343 = vunpack.c.h.b16 %v901
          %v1344 = vunpack.c.l.b16 %v902
          %v1345 = vunpack.c.h.b16 %v902
          %v1346 = vunpack.c.l.b16 %v903
          %v1347 = vunpack.c.h.b16 %v903
          %v1348 = vunpack.c.l.b16 %v904
          %v1349 = vunpack.c.h.b16 %v904
          %v1350 = vunpack.c.l.b16 %v905
          %v1351 = vunpack.c.h.b16 %v905
          %v1352 = vunpack.c.l.b16 %v906
          %v1353 = vunpack.c.h.b16 %v906
          %v1354 = vunpack.c.l.b16 %v907
          %v1355 = vunpack.c.h.b16 %v907
          %v1356 = vunpack.c.l.b16 %v908
          %v1357 = vunpack.c.h.b16 %v908
          %v1358 = vunpack.c.l.b16 %v909
          %v1359 = vunpack.c.h.b16 %v909
          %v1360 = vunpack.c.l.b16 %v910
          %v1361 = vunpack.c.h.b16 %v910
          %v1362 = vunpack.c.l.b16 %v911
          %v1363 = vunpack.c.h.b16 %v911
          %v1364 = vunpack.c.l.b16 %v912
          %v1365 = vunpack.c.h.b16 %v912
          %v1366 = vunpack.c.l.b16 %v913
          %v1367 = vunpack.c.h.b16 %v913
          %v1368 = vunpack.c.l.b16 %v914
          %v1369 = vunpack.c.h.b16 %v914
          %v1370 = vunpack.c.l.b16 %v915
          %v1371 = vunpack.c.h.b16 %v915
          %v1372 = vunpack.c.l.b16 %v916
          %v1373 = vunpack.c.h.b16 %v916
          %v1374 = vunpack.c.l.b16 %v917
          %v1375 = vunpack.c.h.b16 %v917
          %v1376 = vunpack.c.l.b16 %v918
          %v1377 = vunpack.c.h.b16 %v918
          %v1378 = vunpack.c.l.b16 %v919
          %v1379 = vunpack.c.h.b16 %v919
          %v1380 = vunpack.c.l.b16 %v920
          %v1381 = vunpack.c.h.b16 %v920
          %v1382 = vunpack.c.l.b16 %v921
          %v1383 = vunpack.c.h.b16 %v921
          %v1384 = vunpack.c.l.b16 %v922
          %v1385 = vunpack.c.h.b16 %v922
          %v1386 = vunpack.c.l.b16 %v923
          %v1387 = vunpack.c.h.b16 %v923
          %v1388 = vunpack.c.l.b16 %v924
          %v1389 = vunpack.c.h.b16 %v924
          %v1390 = vunpack.c.l.b16 %v925
          %v1391 = vunpack.c.h.b16 %v925
          %v1392 = vunpack.c.l.b16 %v926
          %v1393 = vunpack.c.h.b16 %v926
          %v1394 = vunpack.c.l.b16 %v927
          %v1395 = vunpack.c.h.b16 %v927
          %v1396 = vunpack.c.l.b16 %v928
          %v1397 = vunpack.c.h.b16 %v928
          %v1398 = vunpack.c.l.b16 %v929
          %v1399 = vunpack.c.h.b16 %v929
          %v1400 = vunpack.c.l.b16 %v930
          %v1401 = vunpack.c.h.b16 %v930
          %v1402 = vunpack.c.l.b16 %v931
          %v1403 = vunpack.c.h.b16 %v931
          %v1404 = vunpack.c.l.b16 %v932
          %v1405 = vunpack.c.h.b16 %v932
          %v1406 = vunpack.c.l.b16 %v933
          %v1407 = vunpack.c.h.b16 %v933
          %v1408 = vunpack.c.l.b16 %v934
          %v1409 = vunpack.c.h.b16 %v934
          %v1410 = vunpack.c.l.b16 %v935
          %v1411 = vunpack.c.h.b16 %v935
          %v1412 = vunpack.c.l.b16 %v936
          %v1413 = vunpack.c.h.b16 %v936
          %v1414 = vunpack.c.l.b16 %v937
          %v1415 = vunpack.c.h.b16 %v937
          %v1416 = vunpack.c.l.b16 %v938
          %v1417 = vunpack.c.h.b16 %v938
          %v1418 = vunpack.c.l.b16 %v939
          %v1419 = vunpack.c.h.b16 %v939
          %v1420 = vunpack.c.l.b16 %v940
          %v1421 = vunpack.c.h.b16 %v940
          %v1422 = vunpack.c.l.b16 %v941
          %v1423 = vunpack.c.h.b16 %v941
          %v1424 = vunpack.c.l.b16 %v942
          %v1425 = vunpack.c.h.b16 %v942
          %v1426 = vunpack.c.l.b16 %v943
          %v1427 = vunpack.c.h.b16 %v943
          %v1428 = vunpack.c.l.b16 %v944
          %v1429 = vunpack.c.h.b16 %v944
          %v1430 = vunpack.c.l.b16 %v945
          %v1431 = vunpack.c.h.b16 %v945
          %v1432 = vunpack.c.l.b16 %v946
          %v1433 = vunpack.c.h.b16 %v946
          %v1434 = vunpack.c.l.b16 %v947
          %v1435 = vunpack.c.h.b16 %v947
          %v1436 = vunpack.c.l.b16 %v948
          %v1437 = vunpack.c.h.b16 %v948
          %v1438 = vunpack.c.l.b16 %v949
          %v1439 = vunpack.c.h.b16 %v949
          %v1440 = vunpack.c.l.b16 %v950
          %v1441 = vunpack.c.h.b16 %v950
          %v1442 = vunpack.c.l.b16 %v951
          %v1443 = vunpack.c.h.b16 %v951
          %v1444 = vunpack.c.l.b16 %v952
          %v1445 = vunpack.c.h.b16 %v952
          %v1446 = vunpack.c.l.b16 %v953
          %v1447 = vunpack.c.h.b16 %v953
          %v1448 = vunpack.c.l.b16 %v954
          %v1449 = vunpack.c.h.b16 %v954
          %v1450 = vunpack.c.l.b16 %v955
          %v1451 = vunpack.c.h.b16 %v955
          %v1452 = vunpack.c.l.b16 %v956
          %v1453 = vunpack.c.h.b16 %v956
          %v1454 = vunpack.c.l.b16 %v957
          %v1455 = vunpack.c.h.b16 %v957
          %v1456 = vunpack.c.l.b16 %v958
          %v1457 = vunpack.c.h.b16 %v958
          %v1458 = vunpack.c.l.b16 %v959
          %v1459 = vunpack.c.h.b16 %v959
          %v1460 = vunpack.c.l.b16 %v960
          %v1461 = vunpack.c.h.b16 %v960
          %v1462 = vunpack.c.l.b16 %v961
          %v1463 = vunpack.c.h.b16 %v961
          %v1464 = vunpack.c.l.b16 %v962
          %v1465 = vunpack.c.h.b16 %v962
          %v1466 = vunpack.c.l.b16 %v963
          %v1467 = vunpack.c.h.b16 %v963
          %v1468 = vunpack.c.l.b16 %v964
          %v1469 = vunpack.c.h.b16 %v964
          %v1470 = vunpack.c.l.b16 %v965
          %v1471 = vunpack.c.h.b16 %v965
          %v1472 = vunpack.c.l.b16 %v966
          %v1473 = vunpack.c.h.b16 %v966
          %v1474 = vunpack.c.l.b16 %v967
          %v1475 = vunpack.c.h.b16 %v967
          %v1476 = vunpack.c.l.b16 %v968
          %v1477 = vunpack.c.h.b16 %v968
          %v1478 = vunpack.c.l.b16 %v969
          %v1479 = vunpack.c.h.b16 %v969
          %v1480 = vunpack.c.l.b16 %v970
          %v1481 = vunpack.c.h.b16 %v970
          %v1482 = vunpack.c.l.b16 %v971
          %v1483 = vunpack.c.h.b16 %v971
          %v1484 = vunpack.c.l.b16 %v972
          %v1485 = vunpack.c.h.b16 %v972
          %v1486 = vunpack.c.l.b16 %v973
          %v1487 = vunpack.c.h.b16 %v973
          %v1488 = vunpack.c.l.b16 %v974
          %v1489 = vunpack.c.h.b16 %v974
          %v1490 = vunpack.c.l.b16 %v975
          %v1491 = vunpack.c.h.b16 %v975
          %v1492 = vunpack.c.l.b16 %v976
          %v1493 = vunpack.c.h.b16 %v976
          %v1494 = vunpack.c.l.b16 %v977
          %v1495 = vunpack.c.h.b16 %v977
          %v1496 = vunpack.c.l.b16 %v978
          %v1497 = vunpack.c.h.b16 %v978
          %v1498 = vunpack.c.l.b16 %v979
          %v1499 = vunpack.c.h.b16 %v979
          %v1500 = vunpack.c.l.b16 %v980
          %v1501 = vunpack.c.h.b16 %v980
          %v1502 = vunpack.c.l.b16 %v981
          %v1503 = vunpack.c.h.b16 %v981
          %v1504 = vunpack.c.l.b16 %v982
          %v1505 = vunpack.c.h.b16 %v982
          %v1506 = vunpack.c.l.b16 %v983
          %v1507 = vunpack.c.h.b16 %v983
          %v1508 = vunpack.c.l.b16 %v984
          %v1509 = vunpack.c.h.b16 %v984
          %v1510 = vunpack.c.l.b16 %v985
          %v1511 = vunpack.c.h.b16 %v985
          %v1512 = vunpack.c.l.b16 %v986
          %v1513 = vunpack.c.h.b16 %v986
          %v1514 = vunpack.c.l.b16 %v987
          %v1515 = vunpack.c.h.b16 %v987
          %v1516 = vunpack.c.l.b16 %v988
          %v1517 = vunpack.c.h.b16 %v988
          %v1518 = vunpack.c.l.b16 %v989
          %v1519 = vunpack.c.h.b16 %v989
          %v1520 = vunpack.c.l.b16 %v990
          %v1521 = vunpack.c.h.b16 %v990
          %v1522 = vunpack.c.l.b16 %v991
          %v1523 = vunpack.c.h.b16 %v991
          %v1524 = vunpack.c.l.b16 %v992
          %v1525 = vunpack.c.h.b16 %v992
          %v1526 = vunpack.c.l.b16 %v993
          %v1527 = vunpack.c.h.b16 %v993
          %v1528 = vunpack.c.l.b16 %v994
          %v1529 = vunpack.c.h.b16 %v994
          %v1530 = vunpack.c.l.b16 %v995
          %v1531 = vunpack.c.h.b16 %v995
          %v1532 = vunpack.c.l.b16 %v996
          %v1533 = vunpack.c.h.b16 %v996
          %v1534 = vunpack.c.l.b16 %v997
          %v1535 = vunpack.c.h.b16 %v997
          %v1536 = vunpack.c.l.b16 %v998
          %v1537 = vunpack.c.h.b16 %v998
          %v1538 = vunpack.c.l.b16 %v999
          %v1539 = vunpack.c.h.b16 %v999
          %v1540 = vunpack.c.l.b16 %v1000
          %v1541 = vunpack.c.h.b16 %v1000
          %v1542 = vunpack.c.l.b16 %v1001
          %v1543 = vunpack.c.h.b16 %v1001
          %v1544 = vunpack.c.l.b16 %v1002
          %v1545 = vunpack.c.h.b16 %v1002
          %v1546 = vunpack.c.l.b16 %v1003
          %v1547 = vunpack.c.h.b16 %v1003
          %v1548 = vunpack.c.l.b16 %v1004
          %v1549 = vunpack.c.h.b16 %v1004
          %v1550 = vunpack.c.l.b16 %v1005
          %v1551 = vunpack.c.h.b16 %v1005
          %v1552 = vunpack.c.l.b16 %v1006
          %v1553 = vunpack.c.h.b16 %v1006
          %v1554 = vunpack.c.l.b16 %v1007
          %v1555 = vunpack.c.h.b16 %v1007
          %v1556 = vunpack.c.l.b16 %v1008
          %v1557 = vunpack.c.h.b16 %v1008
          %v1558 = vunpack.c.l.b16 %v1009
          %v1559 = vunpack.c.h.b16 %v1009
          %v1560 = vunpack.c.l.b16 %v1010
          %v1561 = vunpack.c.h.b16 %v1010
          %v1562 = vunpack.c.l.b16 %v1011
          %v1563 = vunpack.c.h.b16 %v1011
          %v1564 = vunpack.c.l.b16 %v1012
          %v1565 = vunpack.c.h.b16 %v1012
          %v1566 = vunpack.c.l.b16 %v1013
          %v1567 = vunpack.c.h.b16 %v1013
          %v1568 = vunpack.c.l.b16 %v1014
          %v1569 = vunpack.c.h.b16 %v1014
          %v1570 = vunpack.c.l.b16 %v1015
          %v1571 = vunpack.c.h.b16 %v1015
          %v1572 = vunpack.c.l.b16 %v1016
          %v1573 = vunpack.c.h.b16 %v1016
          %v1574 = vunpack.c.l.b16 %v1017
          %v1575 = vunpack.c.h.b16 %v1017
          %v1576 = vunpack.c.l.b16 %v1018
          %v1577 = vunpack.c.h.b16 %v1018
          %v1578 = vunpack.c.l.b16 %v1019
          %v1579 = vunpack.c.h.b16 %v1019
          %v1580 = vunpack.c.l.b16 %v1020
          %v1581 = vunpack.c.h.b16 %v1020
          %v1582 = vunpack.c.l.b16 %v1021
          %v1583 = vunpack.c.h.b16 %v1021
          %v1584 = vunpack.c.l.b16 %v1022
          %v1585 = vunpack.c.h.b16 %v1022
          %v1586 = vunpack.c.l.b16 %v1023
          %v1587 = vunpack.c.h.b16 %v1023
          %v1588 = vunpack.c.l.b16 %v1024
          %v1589 = vunpack.c.h.b16 %v1024
          %v1590 = vunpack.c.l.b16 %v1025
          %v1591 = vunpack.c.h.b16 %v1025
          %v1592 = vunpack.c.l.b16 %v1026
          %v1593 = vunpack.c.h.b16 %v1026
          %v1594 = vunpack.c.l.b16 %v1027
          %v1595 = vunpack.c.h.b16 %v1027
          %v1596 = vunpack.c.l.b16 %v1028
          %v1597 = vunpack.c.h.b16 %v1028
          %v1598 = vunpack.c.l.b16 %v1029
          %v1599 = vunpack.c.h.b16 %v1029
          %v1600 = vunpack.c.l.b16 %v1030
          %v1601 = vunpack.c.h.b16 %v1030
          %v1602 = vunpack.c.l.b16 %v1031
          %v1603 = vunpack.c.h.b16 %v1031
          %v1604 = vunpack.c.l.b16 %v1032
          %v1605 = vunpack.c.h.b16 %v1032
          %v1606 = vunpack.c.l.b16 %v1033
          %v1607 = vunpack.c.h.b16 %v1033
          %v1608 = vunpack.c.l.b16 %v1034
          %v1609 = vunpack.c.h.b16 %v1034
          %v1610 = vunpack.c.l.b16 %v1035
          %v1611 = vunpack.c.h.b16 %v1035
          %v1612 = vunpack.c.l.b16 %v1036
          %v1613 = vunpack.c.h.b16 %v1036
          %v1614 = vunpack.c.l.b16 %v1037
          %v1615 = vunpack.c.h.b16 %v1037
          %v1616 = vunpack.c.l.b16 %v1038
          %v1617 = vunpack.c.h.b16 %v1038
          %v1618 = vunpack.c.l.b16 %v1039
          %v1619 = vunpack.c.h.b16 %v1039
          %v1620 = vunpack.c.l.b16 %v1040
          %v1621 = vunpack.c.h.b16 %v1040
          %v1622 = vunpack.c.l.b16 %v1041
          %v1623 = vunpack.c.h.b16 %v1041
          %v1624 = vunpack.c.l.b16 %v1042
          %v1625 = vunpack.c.h.b16 %v1042
          %v1626 = vunpack.c.l.b16 %v1043
          %v1627 = vunpack.c.h.b16 %v1043
          %v1628 = vunpack.c.l.b16 %v1044
          %v1629 = vunpack.c.h.b16 %v1044
          %v1630 = vunpack.c.l.b16 %v1045
          %v1631 = vunpack.c.h.b16 %v1045
          %v1632 = vunpack.c.l.b16 %v1046
          %v1633 = vunpack.c.h.b16 %v1046
          %v1634 = vunpack.c.l.b16 %v1047
          %v1635 = vunpack.c.h.b16 %v1047
          %v1636 = vunpack.c.l.b16 %v1048
          %v1637 = vunpack.c.h.b16 %v1048
          %v1638 = vunpack.c.l.b16 %v1049
          %v1639 = vunpack.c.h.b16 %v1049
          %v1640 = vunpack.c.l.b16 %v1050
          %v1641 = vunpack.c.h.b16 %v1050
          %v1642 = vunpack.c.l.b16 %v1051
          %v1643 = vunpack.c.h.b16 %v1051
          %v1644 = vunpack.c.l.b16 %v1052
          %v1645 = vunpack.c.h.b16 %v1052
          %v1646 = vunpack.c.l.b16 %v1053
          %v1647 = vunpack.c.h.b16 %v1053
          %v1648 = vunpack.c.l.b16 %v1054
          %v1649 = vunpack.c.h.b16 %v1054
          %v1650 = vunpack.c.l.b16 %v1055
          %v1651 = vunpack.c.h.b16 %v1055
          %v1652 = vunpack.c.l.b16 %v1056
          %v1653 = vunpack.c.h.b16 %v1056
          %v1654 = vunpack.c.l.b16 %v1057
          %v1655 = vunpack.c.h.b16 %v1057
          %v1656 = vunpack.c.l.b16 %v1058
          %v1657 = vunpack.c.h.b16 %v1058
          %v1658 = vunpack.c.l.b16 %v1059
          %v1659 = vunpack.c.h.b16 %v1059
          %v1660 = vunpack.c.l.b16 %v1060
          %v1661 = vunpack.c.h.b16 %v1060
          %v1662 = vunpack.c.l.b16 %v1061
          %v1663 = vunpack.c.h.b16 %v1061
          %v1664 = vunpack.c.l.b16 %v1062
          %v1665 = vunpack.c.h.b16 %v1062
          %v1666 = vunpack.c.l.b16 %v1063
          %v1667 = vunpack.c.h.b16 %v1063
          %v1668 = vunpack.c.l.b16 %v1064
          %v1669 = vunpack.c.h.b16 %v1064
          %v1670 = vunpack.c.l.b16 %v1065
          %v1671 = vunpack.c.h.b16 %v1065
          %v1672 = vunpack.c.l.b16 %v1066
          %v1673 = vunpack.c.h.b16 %v1066
          %v1674 = vunpack.c.l.b16 %v1067
          %v1675 = vunpack.c.h.b16 %v1067
          %v1676 = vpack.c.b16 %v1296, %v1292
          %v1677 = vpack.c.b16 %v1297, %v1293
          %v1678 = vpack.c.b16 %v1298, %v1294
          %v1679 = vpack.c.b16 %v1299, %v1295
          %v1680 = vpack.c.b16 %v1304, %v1300
          %v1681 = vpack.c.b16 %v1305, %v1301
          %v1682 = vpack.c.b16 %v1306, %v1302
          %v1683 = vpack.c.b16 %v1307, %v1303
          %v1684 = vpack.c.b16 %v1312, %v1308
          %v1685 = vpack.c.b16 %v1313, %v1309
          %v1686 = vpack.c.b16 %v1314, %v1310
          %v1687 = vpack.c.b16 %v1315, %v1311
          %v1688 = vpack.c.b16 %v1320, %v1316
          %v1689 = vpack.c.b16 %v1321, %v1317
          %v1690 = vpack.c.b16 %v1322, %v1318
          %v1691 = vpack.c.b16 %v1323, %v1319
          %v1692 = vpack.c.b16 %v1328, %v1324
          %v1693 = vpack.c.b16 %v1329, %v1325
          %v1694 = vpack.c.b16 %v1330, %v1326
          %v1695 = vpack.c.b16 %v1331, %v1327
          %v1696 = vpack.c.b16 %v1336, %v1332
          %v1697 = vpack.c.b16 %v1337, %v1333
          %v1698 = vpack.c.b16 %v1338, %v1334
          %v1699 = vpack.c.b16 %v1339, %v1335
          %v1700 = vpack.c.b16 %v1344, %v1340
          %v1701 = vpack.c.b16 %v1345, %v1341
          %v1702 = vpack.c.b16 %v1346, %v1342
          %v1703 = vpack.c.b16 %v1347, %v1343
          %v1704 = vpack.c.b16 %v1352, %v1348
          %v1705 = vpack.c.b16 %v1353, %v1349
          %v1706 = vpack.c.b16 %v1354, %v1350
          %v1707 = vpack.c.b16 %v1355, %v1351
          %v1708 = vpack.c.b16 %v1360, %v1356
          %v1709 = vpack.c.b16 %v1361, %v1357
          %v1710 = vpack.c.b16 %v1362, %v1358
          %v1711 = vpack.c.b16 %v1363, %v1359
          %v1712 = vpack.c.b16 %v1368, %v1364
          %v1713 = vpack.c.b16 %v1369, %v1365
          %v1714 = vpack.c.b16 %v1370, %v1366
          %v1715 = vpack.c.b16 %v1371, %v1367
          %v1716 = vpack.c.b16 %v1376, %v1372
          %v1717 = vpack.c.b16 %v1377, %v1373
          %v1718 = vpack.c.b16 %v1378, %v1374
          %v1719 = vpack.c.b16 %v1379, %v1375
          %v1720 = vpack.c.b16 %v1384, %v1380
          %v1721 = vpack.c.b16 %v1385, %v1381
          %v1722 = vpack.c.b16 %v1386, %v1382
          %v1723 = vpack.c.b16 %v1387, %v1383
          %v1724 = vpack.c.b16 %v1392, %v1388
          %v1725 = vpack.c.b16 %v1393, %v1389
          %v1726 = vpack.c.b16 %v1394, %v1390
          %v1727 = vpack.c.b16 %v1395, %v1391
          %v1728 = vpack.c.b16 %v1400, %v1396
          %v1729 = vpack.c.b16 %v1401, %v1397
          %v1730 = vpack.c.b16 %v1402, %v1398
          %v1731 = vpack.c.b16 %v1403, %v1399
          %v1732 = vpack.c.b16 %v1408, %v1404
          %v1733 = vpack.c.b16 %v1409, %v1405
          %v1734 = vpack.c.b16 %v1410, %v1406
          %v1735 = vpack.c.b16 %v1411, %v1407
          %v1736 = vpack.c.b16 %v1416, %v1412
          %v1737 = vpack.c.b16 %v1417, %v1413
          %v1738 = vpack.c.b16 %v1418, %v1414
          %v1739 = vpack.c.b16 %v1419, %v1415
          %v1740 = vpack.c.b16 %v1424, %v1420
          %v1741 = vpack.c.b16 %v1425, %v1421
          %v1742 = vpack.c.b16 %v1426, %v1422
          %v1743 = vpack.c.b16 %v1427, %v1423
          %v1744 = vpack.c.b16 %v1432, %v1428
          %v1745 = vpack.c.b16 %v1433, %v1429
          %v1746 = vpack.c.b16 %v1434, %v1430
          %v1747 = vpack.c.b16 %v1435, %v1431
          %v1748 = vpack.c.b16 %v1440, %v1436
          %v1749 = vpack.c.b16 %v1441, %v1437
          %v1750 = vpack.c.b16 %v1442, %v1438
          %v1751 = vpack.c.b16 %v1443, %v1439
          %v1752 = vpack.c.b16 %v1448, %v1444
          %v1753 = vpack.c.b16 %v1449, %v1445
          %v1754 = vpack.c.b16 %v1450, %v1446
          %v1755 = vpack.c.b16 %v1451, %v1447
          %v1756 = vpack.c.b16 %v1456, %v1452
          %v1757 = vpack.c.b16 %v1457, %v1453
          %v1758 = vpack.c.b16 %v1458, %v1454
          %v1759 = vpack.c.b16 %v1459, %v1455
          %v1760 = vpack.c.b16 %v1464, %v1460
          %v1761 = vpack.c.b16 %v1465, %v1461
          %v1762 = vpack.c.b16 %v1466, %v1462
          %v1763 = vpack.c.b16 %v1467, %v1463
          %v1764 = vpack.c.b16 %v1472, %v1468
          %v1765 = vpack.c.b16 %v1473, %v1469
          %v1766 = vpack.c.b16 %v1474, %v1470
          %v1767 = vpack.c.b16 %v1475, %v1471
          %v1768 = vpack.c.b16 %v1480, %v1476
          %v1769 = vpack.c.b16 %v1481, %v1477
          %v1770 = vpack.c.b16 %v1482, %v1478
          %v1771 = vpack.c.b16 %v1483, %v1479
          %v1772 = vpack.c.b16 %v1488, %v1484
          %v1773 = vpack.c.b16 %v1489, %v1485
          %v1774 = vpack.c.b16 %v1490, %v1486
          %v1775 = vpack.c.b16 %v1491, %v1487
          %v1776 = vpack.c.b16 %v1496, %v1492
          %v1777 = vpack.c.b16 %v1497, %v1493
          %v1778 = vpack.c.b16 %v1498, %v1494
          %v1779 = vpack.c.b16 %v1499, %v1495
          %v1780 = vpack.c.b16 %v1504, %v1500
          %v1781 = vpack.c.b16 %v1505, %v1501
          %v1782 = vpack.c.b16 %v1506, %v1502
          %v1783 = vpack.c.b16 %v1507, %v1503
          %v1784 = vpack.c.b16 %v1512, %v1508
          %v1785 = vpack.c.b16 %v1513, %v1509
          %v1786 = vpack.c.b16 %v1514, %v1510
          %v1787 = vpack.c.b16 %v1515, %v1511
          %v1788 = vpack.c.b16 %v1520, %v1516
          %v1789 = vpack.c.b16 %v1521, %v1517
          %v1790 = vpack.c.b16 %v1522, %v1518
          %v1791 = vpack.c.b16 %v1523, %v1519
          %v1792 = vpack.c.b16 %v1528, %v1524
          %v1793 = vpack.c.b16 %v1529, %v1525
          %v1794 = vpack.c.b16 %v1530, %v1526
          %v1795 = vpack.c.b16 %v1531, %v1527
          %v1796 = vpack.c.b16 %v1536, %v1532
          %v1797 = vpack.c.b16 %v1537, %v1533
          %v1798 = vpack.c.b16 %v1538, %v1534
          %v1799 = vpack.c.b16 %v1539, %v1535
          %v1800 = vpack.c.b16 %v1544, %v1540
          %v1801 = vpack.c.b16 %v1545, %v1541
          %v1802 = vpack.c.b16 %v1546, %v1542
          %v1803 = vpack.c.b16 %v1547, %v1543
          %v1804 = vpack.c.b16 %v1552, %v1548
          %v1805 = vpack.c.b16 %v1553, %v1549
          %v1806 = vpack.c.b16 %v1554, %v1550
          %v1807 = vpack.c.b16 %v1555, %v1551
          %v1808 = vpack.c.b16 %v1560, %v1556
          %v1809 = vpack.c.b16 %v1561, %v1557
          %v1810 = vpack.c.b16 %v1562, %v1558
          %v1811 = vpack.c.b16 %v1563, %v1559
          %v1812 = vpack.c.b16 %v1568, %v1564
          %v1813 = vpack.c.b16 %v1569, %v1565
          %v1814 = vpack.c.b16 %v1570, %v1566
          %v1815 = vpack.c.b16 %v1571, %v1567
          %v1816 = vpack.c.b16 %v1576, %v1572
          %v1817 = vpack.c.b16 %v1577, %v1573
          %v1818 = vpack.c.b16 %v1578, %v1574
          %v1819 = vpack.c.b16 %v1579, %v1575
          %v1820 = vpack.c.b16 %v1584, %v1580
          %v1821 = vpack.c.b16 %v1585, %v1581
          %v1822 = vpack.c.b16 %v1586, %v1582
          %v1823 = vpack.c.b16 %v1587, %v1583
          %v1824 = vpack.c.b16 %v1592, %v1588
          %v1825 = vpack.c.b16 %v1593, %v1589
          %v1826 = vpack.c.b16 %v1594, %v1590
          %v1827 = vpack.c.b16 %v1595, %v1591
          %v1828 = vpack.c.b16 %v1600, %v1596
          %v1829 = vpack.c.b16 %v1601, %v1597
          %v1830 = vpack.c.b16 %v1602, %v1598
          %v1831 = vpack.c.b16 %v1603, %v1599
          %v1832 = vpack.c.b16 %v1608, %v1604
          %v1833 = vpack.c.b16 %v1609, %v1605
          %v1834 = vpack.c.b16 %v1610, %v1606
          %v1835 = vpack.c.b16 %v1611, %v1607
          %v1836 = vpack.c.b16 %v1616, %v1612
          %v1837 = vpack.c.b16 %v1617, %v1613
          %v1838 = vpack.c.b16 %v1618, %v1614
          %v1839 = vpack.c.b16 %v1619, %v1615
          %v1840 = vpack.c.b16 %v1624, %v1620
          %v1841 = vpack.c.b16 %v1625, %v1621
          %v1842 = vpack.c.b16 %v1626, %v1622
          %v1843 = vpack.c.b16 %v1627, %v1623
          %v1844 = vpack.c.b16 %v1632, %v1628
          %v1845 = vpack.c.b16 %v1633, %v1629
          %v1846 = vpack.c.b16 %v1634, %v1630
          %v1847 = vpack.c.b16 %v1635, %v1631
          %v1848 = vpack.c.b16 %v1640, %v1636
          %v1849 = vpack.c.b16 %v1641, %v1637
          %v1850 = vpack.c.b16 %v1642, %v1638
          %v1851 = vpack.c.b16 %v1643, %v1639
          %v1852 = vpack.c.b16 %v1648, %v1644
          %v1853 = vpack.c.b16 %v1649, %v1645
          %v1854 = vpack.c.b16 %v1650, %v1646
          %v1855 = vpack.c.b16 %v1651, %v1647
          %v1856 = vpack.c.b16 %v1656, %v1652
          %v1857 = vpack.c.b16 %v1657, %v1653
          %v1858 = vpack.c.b16 %v1658, %v1654
          %v1859 = vpack.c.b16 %v1659, %v1655
          %v1860 = vpack.c.b16 %v1664, %v1660
          %v1861 = vpack.c.b16 %v1665, %v1661
          %v1862 = vpack.c.b16 %v1666, %v1662
          %v1863 = vpack.c.b16 %v1667, %v1663
          %v1864 = vpack.c.b16 %v1672, %v1668
          %v1865 = vpack.c.b16 %v1673, %v1669
          %v1866 = vpack.c.b16 %v1674, %v1670
          %v1867 = vpack.c.b16 %v1675, %v1671
          %2060 = vmatprep.subr.bf16.mxu0 %v1677
          %2061 = vmatpush1.bf16.msra.mxu0 %v1676
          %2062 = vmatprep.subr.bf16.mxu0 %v1681
          %2063 = vmatpush1.bf16.msra.mxu0 %v1680
          %2064 = vmatprep.subr.bf16.mxu0 %v1685
          %2065 = vmatpush1.bf16.msra.mxu0 %v1684
          %2066 = vmatprep.subr.bf16.mxu0 %v1689
          %2067 = vmatpush1.bf16.msra.mxu0 %v1688
          %2068 = vmatprep.subr.bf16.mxu0 %v1693
          %2069 = vmatpush1.bf16.msra.mxu0 %v1692
          %2070 = vmatprep.subr.bf16.mxu0 %v1697
          %2071 = vmatpush1.bf16.msra.mxu0 %v1696
          %2072 = vmatprep.subr.bf16.mxu0 %v1701
          %2073 = vmatpush1.bf16.msra.mxu0 %v1700
          %2074 = vmatprep.subr.bf16.mxu0 %v1705
          %2075 = vmatpush1.bf16.msra.mxu0 %v1704
          %2076 = vmatprep.subr.bf16.mxu0 %v1709
          %2077 = vmatpush1.bf16.msra.mxu0 %v1708
          %2078 = vmatprep.subr.bf16.mxu0 %v1713
          %2079 = vmatpush1.bf16.msra.mxu0 %v1712
          %2080 = vmatprep.subr.bf16.mxu0 %v1717
          %2081 = vmatpush1.bf16.msra.mxu0 %v1716
          %2082 = vmatprep.subr.bf16.mxu0 %v1721
          %2083 = vmatpush1.bf16.msra.mxu0 %v1720
          %2084 = vmatprep.subr.bf16.mxu0 %v1725
          %2085 = vmatpush1.bf16.msra.mxu0 %v1724
          %2086 = vmatprep.subr.bf16.mxu0 %v1729
          %2087 = vmatpush1.bf16.msra.mxu0 %v1728
          %2088 = vmatprep.subr.bf16.mxu0 %v1733
          %2089 = vmatpush1.bf16.msra.mxu0 %v1732
          %2090 = vmatprep.subr.bf16.mxu0 %v1737
          %2091 = vmatpush1.bf16.msra.mxu0 %v1736
          %2092 = vmatprep.mubr.bf16.mxu0 %v871
          %2093 = vmatmul.mubr.bf16.gmra.mrb[0].mxu0 %v870
          %v2094 = vpop.f32.mrb[0].mxu0
          %v2095 = vadd.f32 %v1096, %v2094
          %v2096 = vpop.f32.mrb[0].mxu0
          %v2097 = vadd.f32 %v1097, %v2096
          %v2098 = vpop.f32.mrb[0].mxu0
          %v2099 = vpop.f32.mrb[0].mxu0
          %2100 = vdwg.mxu0
          %2101 = vmatprep.subr.bf16.mxu0 %v1741
          %2102 = vmatpush1.bf16.msra.mxu0 %v1740
          %2103 = vmatprep.subr.bf16.mxu0 %v1745
          %2104 = vmatpush1.bf16.msra.mxu0 %v1744
          %2105 = vmatprep.subr.bf16.mxu0 %v1749
          %2106 = vmatpush1.bf16.msra.mxu0 %v1748
          %2107 = vmatprep.subr.bf16.mxu0 %v1753
          %2108 = vmatpush1.bf16.msra.mxu0 %v1752
          %2109 = vmatprep.subr.bf16.mxu0 %v1757
          %2110 = vmatpush1.bf16.msra.mxu0 %v1756
          %2111 = vmatprep.subr.bf16.mxu0 %v1761
          %2112 = vmatpush1.bf16.msra.mxu0 %v1760
          %2113 = vmatprep.subr.bf16.mxu0 %v1765
          %2114 = vmatpush1.bf16.msra.mxu0 %v1764
          %2115 = vmatprep.subr.bf16.mxu0 %v1769
          %2116 = vmatpush1.bf16.msra.mxu0 %v1768
          %2117 = vmatprep.subr.bf16.mxu0 %v1773
          %2118 = vmatpush1.bf16.msra.mxu0 %v1772
          %2119 = vmatprep.subr.bf16.mxu0 %v1777
          %2120 = vmatpush1.bf16.msra.mxu0 %v1776
          %2121 = vmatprep.subr.bf16.mxu0 %v1781
          %2122 = vmatpush1.bf16.msra.mxu0 %v1780
          %2123 = vmatprep.subr.bf16.mxu0 %v1785
          %2124 = vmatpush1.bf16.msra.mxu0 %v1784
          %2125 = vmatprep.subr.bf16.mxu0 %v1789
          %2126 = vmatpush1.bf16.msra.mxu0 %v1788
          %2127 = vmatprep.subr.bf16.mxu0 %v1793
          %2128 = vmatpush1.bf16.msra.mxu0 %v1792
          %2129 = vmatprep.subr.bf16.mxu0 %v1797
          %2130 = vmatpush1.bf16.msra.mxu0 %v1796
          %2131 = vmatprep.subr.bf16.mxu0 %v1801
          %2132 = vmatpush1.bf16.msra.mxu0 %v1800
          %2133 = vmatprep.mubr.bf16.mxu0 %v873
          %2134 = vmatmul.mubr.bf16.gmra.mrb[0].mxu0 %v872
          %v2135 = vpop.f32.mrb[0].mxu0
          %v2136 = vadd.f32 %v2095, %v2135
          %v2137 = vpop.f32.mrb[0].mxu0
          %v2138 = vadd.f32 %v2097, %v2137
          %v2139 = vpop.f32.mrb[0].mxu0
          %v2140 = vpop.f32.mrb[0].mxu0
          %2141 = vdwg.mxu0
          %2142 = vmatprep.subr.bf16.mxu0 %v1805
          %2143 = vmatpush1.bf16.msra.mxu0 %v1804
          %2144 = vmatprep.subr.bf16.mxu0 %v1809
          %2145 = vmatpush1.bf16.msra.mxu0 %v1808
          %2146 = vmatprep.subr.bf16.mxu0 %v1813
          %2147 = vmatpush1.bf16.msra.mxu0 %v1812
          %2148 = vmatprep.subr.bf16.mxu0 %v1817
          %2149 = vmatpush1.bf16.msra.mxu0 %v1816
          %2150 = vmatprep.subr.bf16.mxu0 %v1821
          %2151 = vmatpush1.bf16.msra.mxu0 %v1820
          %2152 = vmatprep.subr.bf16.mxu0 %v1825
          %2153 = vmatpush1.bf16.msra.mxu0 %v1824
          %2154 = vmatprep.subr.bf16.mxu0 %v1829
          %2155 = vmatpush1.bf16.msra.mxu0 %v1828
          %2156 = vmatprep.subr.bf16.mxu0 %v1833
          %2157 = vmatpush1.bf16.msra.mxu0 %v1832
          %2158 = vmatprep.subr.bf16.mxu0 %v1837
          %2159 = vmatpush1.bf16.msra.mxu0 %v1836
          %2160 = vmatprep.subr.bf16.mxu0 %v1841
          %2161 = vmatpush1.bf16.msra.mxu0 %v1840
          %2162 = vmatprep.subr.bf16.mxu0 %v1845
          %2163 = vmatpush1.bf16.msra.mxu0 %v1844
          %2164 = vmatprep.subr.bf16.mxu0 %v1849
          %2165 = vmatpush1.bf16.msra.mxu0 %v1848
          %2166 = vmatprep.subr.bf16.mxu0 %v1853
          %2167 = vmatpush1.bf16.msra.mxu0 %v1852
          %2168 = vmatprep.subr.bf16.mxu0 %v1857
          %2169 = vmatpush1.bf16.msra.mxu0 %v1856
          %2170 = vmatprep.subr.bf16.mxu0 %v1861
          %2171 = vmatpush1.bf16.msra.mxu0 %v1860
          %2172 = vmatprep.subr.bf16.mxu0 %v1865
          %2173 = vmatpush1.bf16.msra.mxu0 %v1864
          %2174 = vmatprep.mubr.bf16.mxu0 %v875
          %2175 = vmatmul.mubr.bf16.gmra.mrb[0].mxu0 %v874
          %v2176 = vpop.f32.mrb[0].mxu0
          %v2177 = vadd.f32 %v2136, %v2176
          %v2178 = vpop.f32.mrb[0].mxu0
          %v2179 = vadd.f32 %v2138, %v2178
          %v2180 = vpop.f32.mrb[0].mxu0
          %v2181 = vpop.f32.mrb[0].mxu0
          %2182 = vdwg.mxu0
          %2183 = vmatprep.subr.bf16.mxu0 %v1679
          %2184 = vmatpush1.bf16.msra.mxu0 %v1678
          %2185 = vmatprep.subr.bf16.mxu0 %v1683
          %2186 = vmatpush1.bf16.msra.mxu0 %v1682
          %2187 = vmatprep.subr.bf16.mxu0 %v1687
          %2188 = vmatpush1.bf16.msra.mxu0 %v1686
          %2189 = vmatprep.subr.bf16.mxu0 %v1691
          %2190 = vmatpush1.bf16.msra.mxu0 %v1690
          %2191 = vmatprep.subr.bf16.mxu0 %v1695
          %2192 = vmatpush1.bf16.msra.mxu0 %v1694
          %2193 = vmatprep.subr.bf16.mxu0 %v1699
          %2194 = vmatpush1.bf16.msra.mxu0 %v1698
          %2195 = vmatprep.subr.bf16.mxu0 %v1703
          %2196 = vmatpush1.bf16.msra.mxu0 %v1702
          %2197 = vmatprep.subr.bf16.mxu0 %v1707
          %2198 = vmatpush1.bf16.msra.mxu0 %v1706
          %2199 = vmatprep.subr.bf16.mxu0 %v1711
          %2200 = vmatpush1.bf16.msra.mxu0 %v1710
          %2201 = vmatprep.subr.bf16.mxu0 %v1715
          %2202 = vmatpush1.bf16.msra.mxu0 %v1714
          %2203 = vmatprep.subr.bf16.mxu0 %v1719
          %2204 = vmatpush1.bf16.msra.mxu0 %v1718
          %2205 = vmatprep.subr.bf16.mxu0 %v1723
          %2206 = vmatpush1.bf16.msra.mxu0 %v1722
          %2207 = vmatprep.subr.bf16.mxu0 %v1727
          %2208 = vmatpush1.bf16.msra.mxu0 %v1726
          %2209 = vmatprep.subr.bf16.mxu0 %v1731
          %2210 = vmatpush1.bf16.msra.mxu0 %v1730
          %2211 = vmatprep.subr.bf16.mxu0 %v1735
          %2212 = vmatpush1.bf16.msra.mxu0 %v1734
          %2213 = vmatprep.subr.bf16.mxu0 %v1739
          %2214 = vmatpush1.bf16.msra.mxu0 %v1738
          %2215 = vmatprep.mubr.bf16.mxu0 %v871
          %2216 = vmatmul.mubr.bf16.gmra.mrb[0].mxu0 %v870
          %v2217 = vpop.f32.mrb[0].mxu0
          %v2218 = vadd.f32 %v1098, %v2217
          %v2219 = vpop.f32.mrb[0].mxu0
          %v2220 = vadd.f32 %v1099, %v2219
          %v2221 = vpop.f32.mrb[0].mxu0
          %v2222 = vpop.f32.mrb[0].mxu0
          %2223 = vdwg.mxu0
          %2224 = vmatprep.subr.bf16.mxu0 %v1743
          %2225 = vmatpush1.bf16.msra.mxu0 %v1742
          %2226 = vmatprep.subr.bf16.mxu0 %v1747
          %2227 = vmatpush1.bf16.msra.mxu0 %v1746
          %2228 = vmatprep.subr.bf16.mxu0 %v1751
          %2229 = vmatpush1.bf16.msra.mxu0 %v1750
          %2230 = vmatprep.subr.bf16.mxu0 %v1755
          %2231 = vmatpush1.bf16.msra.mxu0 %v1754
          %2232 = vmatprep.subr.bf16.mxu0 %v1759
          %2233 = vmatpush1.bf16.msra.mxu0 %v1758
          %2234 = vmatprep.subr.bf16.mxu0 %v1763
          %2235 = vmatpush1.bf16.msra.mxu0 %v1762
          %2236 = vmatprep.subr.bf16.mxu0 %v1767
          %2237 = vmatpush1.bf16.msra.mxu0 %v1766
          %2238 = vmatprep.subr.bf16.mxu0 %v1771
          %2239 = vmatpush1.bf16.msra.mxu0 %v1770
          %2240 = vmatprep.subr.bf16.mxu0 %v1775
          %2241 = vmatpush1.bf16.msra.mxu0 %v1774
          %2242 = vmatprep.subr.bf16.mxu0 %v1779
          %2243 = vmatpush1.bf16.msra.mxu0 %v1778
          %2244 = vmatprep.subr.bf16.mxu0 %v1783
          %2245 = vmatpush1.bf16.msra.mxu0 %v1782
          %2246 = vmatprep.subr.bf16.mxu0 %v1787
          %2247 = vmatpush1.bf16.msra.mxu0 %v1786
          %2248 = vmatprep.subr.bf16.mxu0 %v1791
          %2249 = vmatpush1.bf16.msra.mxu0 %v1790
          %2250 = vmatprep.subr.bf16.mxu0 %v1795
          %2251 = vmatpush1.bf16.msra.mxu0 %v1794
          %2252 = vmatprep.subr.bf16.mxu0 %v1799
          %2253 = vmatpush1.bf16.msra.mxu0 %v1798
          %2254 = vmatprep.subr.bf16.mxu0 %v1803
          %2255 = vmatpush1.bf16.msra.mxu0 %v1802
          %2256 = vmatprep.mubr.bf16.mxu0 %v873
          %2257 = vmatmul.mubr.bf16.gmra.mrb[0].mxu0 %v872
          %v2258 = vpop.f32.mrb[0].mxu0
          %v2259 = vadd.f32 %v2218, %v2258
          %v2260 = vpop.f32.mrb[0].mxu0
          %v2261 = vadd.f32 %v2220, %v2260
          %v2262 = vpop.f32.mrb[0].mxu0
          %v2263 = vpop.f32.mrb[0].mxu0
          %2264 = vdwg.mxu0
          %2265 = vmatprep.subr.bf16.mxu0 %v1807
          %2266 = vmatpush1.bf16.msra.mxu0 %v1806
          %2267 = vmatprep.subr.bf16.mxu0 %v1811
          %2268 = vmatpush1.bf16.msra.mxu0 %v1810
          %2269 = vmatprep.subr.bf16.mxu0 %v1815
          %2270 = vmatpush1.bf16.msra.mxu0 %v1814
          %2271 = vmatprep.subr.bf16.mxu0 %v1819
          %2272 = vmatpush1.bf16.msra.mxu0 %v1818
          %2273 = vmatprep.subr.bf16.mxu0 %v1823
          %2274 = vmatpush1.bf16.msra.mxu0 %v1822
          %2275 = vmatprep.subr.bf16.mxu0 %v1827
          %2276 = vmatpush1.bf16.msra.mxu0 %v1826
          %2277 = vmatprep.subr.bf16.mxu0 %v1831
          %2278 = vmatpush1.bf16.msra.mxu0 %v1830
          %2279 = vmatprep.subr.bf16.mxu0 %v1835
          %2280 = vmatpush1.bf16.msra.mxu0 %v1834
          %2281 = vmatprep.subr.bf16.mxu0 %v1839
          %2282 = vmatpush1.bf16.msra.mxu0 %v1838
          %2283 = vmatprep.subr.bf16.mxu0 %v1843
          %2284 = vmatpush1.bf16.msra.mxu0 %v1842
          %2285 = vmatprep.subr.bf16.mxu0 %v1847
          %2286 = vmatpush1.bf16.msra.mxu0 %v1846
          %2287 = vmatprep.subr.bf16.mxu0 %v1851
          %2288 = vmatpush1.bf16.msra.mxu0 %v1850
          %2289 = vmatprep.subr.bf16.mxu0 %v1855
          %2290 = vmatpush1.bf16.msra.mxu0 %v1854
          %2291 = vmatprep.subr.bf16.mxu0 %v1859
          %2292 = vmatpush1.bf16.msra.mxu0 %v1858
          %2293 = vmatprep.subr.bf16.mxu0 %v1863
          %2294 = vmatpush1.bf16.msra.mxu0 %v1862
          %2295 = vmatprep.subr.bf16.mxu0 %v1867
          %2296 = vmatpush1.bf16.msra.mxu0 %v1866
          %2297 = vmatprep.mubr.bf16.mxu0 %v875
          %2298 = vmatmul.mubr.bf16.gmra.mrb[0].mxu0 %v874
          %v2299 = vpop.f32.mrb[0].mxu0
          %v2300 = vadd.f32 %v2259, %v2299
          %v2301 = vpop.f32.mrb[0].mxu0
          %v2302 = vadd.f32 %v2261, %v2301
          %v2303 = vpop.f32.mrb[0].mxu0
          %v2304 = vpop.f32.mrb[0].mxu0
          %2305 = vdwg.mxu0
          %v2306 = vld [vmem:[%s8] sm:$0xf]
          %v2308 = vlaneseq
          %v2309 = vshrl.u32 %v2308, 7
          %v2310 = vsub.s32 0, %v2309
          %v2311 = vrot.slane %v2306, %v2310
          %v2312 = vlaneseq
          %v2313 = vshrl.u32 %v2312, 7
          %v2314 = vsub.s32 1, %v2313
          %v2315 = vrot.slane %v2306, %v2314
          %v2316 = vlaneseq
          %v2317 = vshrl.u32 %v2316, 7
          %v2318 = vsub.s32 2, %v2317
          %v2319 = vrot.slane %v2306, %v2318
          %v2320 = vlaneseq
          %v2321 = vshrl.u32 %v2320, 7
          %v2322 = vsub.s32 3, %v2321
          %v2323 = vrot.slane %v2306, %v2322
          %v2328 = vadd.f32 %v2177, %v2311
          %v2329 = vadd.f32 %v2179, %v2315
          %v2330 = vadd.f32 %v2300, %v2319
          %v2331 = vadd.f32 %v2302, %v2323
          %v2332 = vmax.f32 %v2328, 0.0
          %v2333 = vmax.f32 %v2329, 0.0
          %v2334 = vmax.f32 %v2330, 0.0
          %v2335 = vmax.f32 %v2331, 0.0
          %v2336 = vpack.c.bf16 %v2332, %v2332
          %v2337 = vpack.c.bf16 %v2333, %v2333
          %v2338 = vpack.c.bf16 %v2334, %v2334
          %v2339 = vpack.c.bf16 %v2335, %v2335
          %v2340 = vld [vmem:[%s9] sm:$0xf]
          %v2341 = vld [vmem:[%s9 + $0x4] sm:$0xf]
          %v2342 = vld [vmem:[%s9 + $0x8] sm:$0xf]
          %v2343 = vld [vmem:[%s9 + $0xc] sm:$0xf]
          %v2344 = vld [vmem:[%s9 + $0x10] sm:$0xf]
          %v2345 = vld [vmem:[%s9 + $0x14] sm:$0xf]
          %v2346 = vld [vmem:[%s9 + $0x18] sm:$0xf]
          %v2347 = vld [vmem:[%s9 + $0x1c] sm:$0xf]
          %v2348 = vld [vmem:[%s9 + $0x20] sm:$0xf]
          %v2349 = vld [vmem:[%s9 + $0x24] sm:$0xf]
          %v2350 = vld [vmem:[%s9 + $0x28] sm:$0xf]
          %v2351 = vld [vmem:[%s9 + $0x2c] sm:$0xf]
          %v2352 = vld [vmem:[%s9 + $0x30] sm:$0xf]
          %v2353 = vld [vmem:[%s9 + $0x34] sm:$0xf]
          %v2354 = vld [vmem:[%s9 + $0x38] sm:$0xf]
          %v2355 = vld [vmem:[%s9 + $0x3c] sm:$0xf]
          %v2356 = vld [vmem:[%s9 + $0x40] sm:$0xf]
          %v2357 = vld [vmem:[%s9 + $0x44] sm:$0xf]
          %v2358 = vld [vmem:[%s9 + $0x48] sm:$0xf]
          %v2359 = vld [vmem:[%s9 + $0x4c] sm:$0xf]
          %v2360 = vld [vmem:[%s9 + $0x50] sm:$0xf]
          %v2361 = vld [vmem:[%s9 + $0x54] sm:$0xf]
          %v2362 = vld [vmem:[%s9 + $0x58] sm:$0xf]
          %v2363 = vld [vmem:[%s9 + $0x5c] sm:$0xf]
          %v2364 = vld [vmem:[%s9 + $0x60] sm:$0xf]
          %v2365 = vld [vmem:[%s9 + $0x64] sm:$0xf]
          %v2366 = vld [vmem:[%s9 + $0x68] sm:$0xf]
          %v2367 = vld [vmem:[%s9 + $0x6c] sm:$0xf]
          %v2368 = vld [vmem:[%s9 + $0x70] sm:$0xf]
          %v2369 = vld [vmem:[%s9 + $0x74] sm:$0xf]
          %v2370 = vld [vmem:[%s9 + $0x78] sm:$0xf]
          %v2371 = vld [vmem:[%s9 + $0x7c] sm:$0xf]
          %v2372 = vld [vmem:[%s9 + $0x80] sm:$0xf]
          %v2373 = vld [vmem:[%s9 + $0x84] sm:$0xf]
          %v2374 = vld [vmem:[%s9 + $0x88] sm:$0xf]
          %v2375 = vld [vmem:[%s9 + $0x8c] sm:$0xf]
          %v2376 = vld [vmem:[%s9 + $0x90] sm:$0xf]
          %v2377 = vld [vmem:[%s9 + $0x94] sm:$0xf]
          %v2378 = vld [vmem:[%s9 + $0x98] sm:$0xf]
          %v2379 = vld [vmem:[%s9 + $0x9c] sm:$0xf]
          %v2380 = vld [vmem:[%s9 + $0xa0] sm:$0xf]
          %v2381 = vld [vmem:[%s9 + $0xa4] sm:$0xf]
          %v2382 = vld [vmem:[%s9 + $0xa8] sm:$0xf]
          %v2383 = vld [vmem:[%s9 + $0xac] sm:$0xf]
          %v2384 = vld [vmem:[%s9 + $0xb0] sm:$0xf]
          %v2385 = vld [vmem:[%s9 + $0xb4] sm:$0xf]
          %v2386 = vld [vmem:[%s9 + $0xb8] sm:$0xf]
          %v2387 = vld [vmem:[%s9 + $0xbc] sm:$0xf]
          %v2388 = vld [vmem:[%s9 + $0xc0] sm:$0xf]
          %v2389 = vld [vmem:[%s9 + $0xc4] sm:$0xf]
          %v2390 = vld [vmem:[%s9 + $0xc8] sm:$0xf]
          %v2391 = vld [vmem:[%s9 + $0xcc] sm:$0xf]
          %v2392 = vld [vmem:[%s9 + $0xd0] sm:$0xf]
          %v2393 = vld [vmem:[%s9 + $0xd4] sm:$0xf]
          %v2394 = vld [vmem:[%s9 + $0xd8] sm:$0xf]
          %v2395 = vld [vmem:[%s9 + $0xdc] sm:$0xf]
          %v2396 = vld [vmem:[%s9 + $0xe0] sm:$0xf]
          %v2397 = vld [vmem:[%s9 + $0xe4] sm:$0xf]
          %v2398 = vld [vmem:[%s9 + $0xe8] sm:$0xf]
          %v2399 = vld [vmem:[%s9 + $0xec] sm:$0xf]
          %v2400 = vld [vmem:[%s9 + $0xf0] sm:$0xf]
          %v2401 = vld [vmem:[%s9 + $0xf4] sm:$0xf]
          %v2402 = vld [vmem:[%s9 + $0xf8] sm:$0xf]
          %v2403 = vld [vmem:[%s9 + $0xfc] sm:$0xf]
          %v2404 = vld [vmem:[%s10] sm:$0x1]
          %v2406 = vlaneseq
          %v2407 = vshrl.u32 %v2406, 7
          %v2408 = vsub.s32 0, %v2407
          %v2409 = vrot.slane %v2404, %v2408
          %v2475 = vunpack.c.l.b16 %v2340
          %v2476 = vunpack.c.l.b16 %v2341
          %v2477 = vunpack.c.l.b16 %v2342
          %v2478 = vunpack.c.l.b16 %v2343
          %v2479 = vunpack.c.l.b16 %v2344
          %v2480 = vunpack.c.l.b16 %v2345
          %v2481 = vunpack.c.l.b16 %v2346
          %v2482 = vunpack.c.l.b16 %v2347
          %v2483 = vunpack.c.l.b16 %v2348
          %v2484 = vunpack.c.l.b16 %v2349
          %v2485 = vunpack.c.l.b16 %v2350
          %v2486 = vunpack.c.l.b16 %v2351
          %v2487 = vunpack.c.l.b16 %v2352
          %v2488 = vunpack.c.l.b16 %v2353
          %v2489 = vunpack.c.l.b16 %v2354
          %v2490 = vunpack.c.l.b16 %v2355
          %v2491 = vunpack.c.l.b16 %v2356
          %v2492 = vunpack.c.l.b16 %v2357
          %v2493 = vunpack.c.l.b16 %v2358
          %v2494 = vunpack.c.l.b16 %v2359
          %v2495 = vunpack.c.l.b16 %v2360
          %v2496 = vunpack.c.l.b16 %v2361
          %v2497 = vunpack.c.l.b16 %v2362
          %v2498 = vunpack.c.l.b16 %v2363
          %v2499 = vunpack.c.l.b16 %v2364
          %v2500 = vunpack.c.l.b16 %v2365
          %v2501 = vunpack.c.l.b16 %v2366
          %v2502 = vunpack.c.l.b16 %v2367
          %v2503 = vunpack.c.l.b16 %v2368
          %v2504 = vunpack.c.l.b16 %v2369
          %v2505 = vunpack.c.l.b16 %v2370
          %v2506 = vunpack.c.l.b16 %v2371
          %v2507 = vunpack.c.l.b16 %v2372
          %v2508 = vunpack.c.l.b16 %v2373
          %v2509 = vunpack.c.l.b16 %v2374
          %v2510 = vunpack.c.l.b16 %v2375
          %v2511 = vunpack.c.l.b16 %v2376
          %v2512 = vunpack.c.l.b16 %v2377
          %v2513 = vunpack.c.l.b16 %v2378
          %v2514 = vunpack.c.l.b16 %v2379
          %v2515 = vunpack.c.l.b16 %v2380
          %v2516 = vunpack.c.l.b16 %v2381
          %v2517 = vunpack.c.l.b16 %v2382
          %v2518 = vunpack.c.l.b16 %v2383
          %v2519 = vunpack.c.l.b16 %v2384
          %v2520 = vunpack.c.l.b16 %v2385
          %v2521 = vunpack.c.l.b16 %v2386
          %v2522 = vunpack.c.l.b16 %v2387
          %v2523 = vunpack.c.l.b16 %v2388
          %v2524 = vunpack.c.l.b16 %v2389
          %v2525 = vunpack.c.l.b16 %v2390
          %v2526 = vunpack.c.l.b16 %v2391
          %v2527 = vunpack.c.l.b16 %v2392
          %v2528 = vunpack.c.l.b16 %v2393
          %v2529 = vunpack.c.l.b16 %v2394
          %v2530 = vunpack.c.l.b16 %v2395
          %v2531 = vunpack.c.l.b16 %v2396
          %v2532 = vunpack.c.l.b16 %v2397
          %v2533 = vunpack.c.l.b16 %v2398
          %v2534 = vunpack.c.l.b16 %v2399
          %v2535 = vunpack.c.l.b16 %v2400
          %v2536 = vunpack.c.l.b16 %v2401
          %v2537 = vunpack.c.l.b16 %v2402
          %v2538 = vunpack.c.l.b16 %v2403
          %v2539 = vpack.c.b16 %v2476, %v2475
          %v2540 = vpack.c.b16 %v2478, %v2477
          %v2541 = vpack.c.b16 %v2480, %v2479
          %v2542 = vpack.c.b16 %v2482, %v2481
          %v2543 = vpack.c.b16 %v2484, %v2483
          %v2544 = vpack.c.b16 %v2486, %v2485
          %v2545 = vpack.c.b16 %v2488, %v2487
          %v2546 = vpack.c.b16 %v2490, %v2489
          %v2547 = vpack.c.b16 %v2492, %v2491
          %v2548 = vpack.c.b16 %v2494, %v2493
          %v2549 = vpack.c.b16 %v2496, %v2495
          %v2550 = vpack.c.b16 %v2498, %v2497
          %v2551 = vpack.c.b16 %v2500, %v2499
          %v2552 = vpack.c.b16 %v2502, %v2501
          %v2553 = vpack.c.b16 %v2504, %v2503
          %v2554 = vpack.c.b16 %v2506, %v2505
          %v2555 = vpack.c.b16 %v2508, %v2507
          %v2556 = vpack.c.b16 %v2510, %v2509
          %v2557 = vpack.c.b16 %v2512, %v2511
          %v2558 = vpack.c.b16 %v2514, %v2513
          %v2559 = vpack.c.b16 %v2516, %v2515
          %v2560 = vpack.c.b16 %v2518, %v2517
          %v2561 = vpack.c.b16 %v2520, %v2519
          %v2562 = vpack.c.b16 %v2522, %v2521
          %v2563 = vpack.c.b16 %v2524, %v2523
          %v2564 = vpack.c.b16 %v2526, %v2525
          %v2565 = vpack.c.b16 %v2528, %v2527
          %v2566 = vpack.c.b16 %v2530, %v2529
          %v2567 = vpack.c.b16 %v2532, %v2531
          %v2568 = vpack.c.b16 %v2534, %v2533
          %v2569 = vpack.c.b16 %v2536, %v2535
          %v2570 = vpack.c.b16 %v2538, %v2537
          %2603 = vmatprep.subr.bf16.mxu0 0
          %2604 = vmatpush1.bf16.msra.mxu0 %v2539
          %2605 = vmatprep.subr.bf16.mxu0 0
          %2606 = vmatpush1.bf16.msra.mxu0 %v2540
          %2607 = vmatprep.subr.bf16.mxu0 0
          %2608 = vmatpush1.bf16.msra.mxu0 %v2541
          %2609 = vmatprep.subr.bf16.mxu0 0
          %2610 = vmatpush1.bf16.msra.mxu0 %v2542
          %2611 = vmatprep.subr.bf16.mxu0 0
          %2612 = vmatpush1.bf16.msra.mxu0 %v2543
          %2613 = vmatprep.subr.bf16.mxu0 0
          %2614 = vmatpush1.bf16.msra.mxu0 %v2544
          %2615 = vmatprep.subr.bf16.mxu0 0
          %2616 = vmatpush1.bf16.msra.mxu0 %v2545
          %2617 = vmatprep.subr.bf16.mxu0 0
          %2618 = vmatpush1.bf16.msra.mxu0 %v2546
          %2619 = vmatprep.subr.bf16.mxu0 0
          %2620 = vmatpush1.bf16.msra.mxu0 %v2547
          %2621 = vmatprep.subr.bf16.mxu0 0
          %2622 = vmatpush1.bf16.msra.mxu0 %v2548
          %2623 = vmatprep.subr.bf16.mxu0 0
          %2624 = vmatpush1.bf16.msra.mxu0 %v2549
          %2625 = vmatprep.subr.bf16.mxu0 0
          %2626 = vmatpush1.bf16.msra.mxu0 %v2550
          %2627 = vmatprep.subr.bf16.mxu0 0
          %2628 = vmatpush1.bf16.msra.mxu0 %v2551
          %2629 = vmatprep.subr.bf16.mxu0 0
          %2630 = vmatpush1.bf16.msra.mxu0 %v2552
          %2631 = vmatprep.subr.bf16.mxu0 0
          %2632 = vmatpush1.bf16.msra.mxu0 %v2553
          %2633 = vmatprep.subr.bf16.mxu0 0
          %2634 = vmatpush1.bf16.msra.mxu0 %v2554
          %2635 = vmatprep.mubr.bf16.mxu0 %v2337
          %2636 = vmatmul.mubr.bf16.gmra.mrb[0].mxu0 %v2336
          %v2637 = vpop.f32.mrb[0].mxu0
          %v2638 = vadd.f32 %v2409, %v2637
          %v2639 = vpop.f32.mrb[0].mxu0
          %v2640 = vpop.f32.mrb[0].mxu0
          %v2641 = vpop.f32.mrb[0].mxu0
          %2642 = vdwg.mxu0
          %2643 = vmatprep.subr.bf16.mxu0 0
          %2644 = vmatpush1.bf16.msra.mxu0 %v2555
          %2645 = vmatprep.subr.bf16.mxu0 0
          %2646 = vmatpush1.bf16.msra.mxu0 %v2556
          %2647 = vmatprep.subr.bf16.mxu0 0
          %2648 = vmatpush1.bf16.msra.mxu0 %v2557
          %2649 = vmatprep.subr.bf16.mxu0 0
          %2650 = vmatpush1.bf16.msra.mxu0 %v2558
          %2651 = vmatprep.subr.bf16.mxu0 0
          %2652 = vmatpush1.bf16.msra.mxu0 %v2559
          %2653 = vmatprep.subr.bf16.mxu0 0
          %2654 = vmatpush1.bf16.msra.mxu0 %v2560
          %2655 = vmatprep.subr.bf16.mxu0 0
          %2656 = vmatpush1.bf16.msra.mxu0 %v2561
          %2657 = vmatprep.subr.bf16.mxu0 0
          %2658 = vmatpush1.bf16.msra.mxu0 %v2562
          %2659 = vmatprep.subr.bf16.mxu0 0
          %2660 = vmatpush1.bf16.msra.mxu0 %v2563
          %2661 = vmatprep.subr.bf16.mxu0 0
          %2662 = vmatpush1.bf16.msra.mxu0 %v2564
          %2663 = vmatprep.subr.bf16.mxu0 0
          %2664 = vmatpush1.bf16.msra.mxu0 %v2565
          %2665 = vmatprep.subr.bf16.mxu0 0
          %2666 = vmatpush1.bf16.msra.mxu0 %v2566
          %2667 = vmatprep.subr.bf16.mxu0 0
          %2668 = vmatpush1.bf16.msra.mxu0 %v2567
          %2669 = vmatprep.subr.bf16.mxu0 0
          %2670 = vmatpush1.bf16.msra.mxu0 %v2568
          %2671 = vmatprep.subr.bf16.mxu0 0
          %2672 = vmatpush1.bf16.msra.mxu0 %v2569
          %2673 = vmatprep.subr.bf16.mxu0 0
          %2674 = vmatpush1.bf16.msra.mxu0 %v2570
          %2675 = vmatprep.mubr.bf16.mxu0 %v2339
          %2676 = vmatmul.mubr.bf16.gmra.mrb[0].mxu0 %v2338
          %v2677 = vpop.f32.mrb[0].mxu0
          %v2678 = vadd.f32 %v2638, %v2677
          %v2679 = vpop.f32.mrb[0].mxu0
          %v2680 = vpop.f32.mrb[0].mxu0
          %v2681 = vpop.f32.mrb[0].mxu0
          %2682 = vdwg.mxu0
          %2683 = vst [vmem:[%s441] sm:$0xff] %v2678
        $region76: #{convnext_with_cellcount_forward.1} parent=63 // pred_fallthru
          _
        %p2684 = scmp.lt.s32.totalorder %s27, 0
        %s2685 = scalar_select %p2684, %s27, 0
        %s2686 = smul.addr %s2685, 8
        %s2687 = scalar_lea.vmem %s11, %s2686
        // Predicated region
        $region77: #{convnext_with_cellcount_forward.1} parent=63 // pred_check
          %p2688 = pneg %p296
        $region78: #{convnext_with_cellcount_forward.1} parent=63 // pred_check_branch
          %2690 = sbr.rel (%p2688) target = $region80
        $region79: #{convnext_with_cellcount_forward.1} parent=63 // pred_region
          _
        $region80: #{convnext_with_cellcount_forward.1} parent=63 // pred_fallthru
          _
        // Predicated region
        $region81: #{convnext_with_cellcount_forward.1} parent=63 // pred_check
          %p2691 = pneg %p296
        $region82: #{convnext_with_cellcount_forward.1} parent=63 // pred_check_branch
          %2693 = sbr.rel (%p2691) target = $region84
        $region83: #{convnext_with_cellcount_forward.1} parent=63 // pred_region
          %p2694 = scmp.lt.s32.totalorder %s27, 0
          %s2695 = scalar_select %p2694, %s27, 0
          %s2696 = smul.addr %s2695, 8
          %s2697 = scalar_lea.vmem %s11, %s2696
        $region84: #{convnext_with_cellcount_forward.1} parent=63 // pred_fallthru
          _
      $region64: #{convnext_with_cellcount_forward.1} parent=5 // pred_fallthru
        _
      %p2698 = scmp.le.s32.totalorder 2, %s18
      // Predicated region
      $region85: #{convnext_with_cellcount_forward.1} parent=5 // pred_check
        %p2699 = pneg %p2698
      $region86: #{convnext_with_cellcount_forward.1} parent=5 // pred_check_branch
        %2701 = sbr.rel (%p2699) target = $region88
      $region87: #{convnext_with_cellcount_forward.1} parent=5 // pred_region
        %s2702 = ssub.s32 %s18, 2
      $region88: #{convnext_with_cellcount_forward.1} parent=5 // pred_fallthru
        _
    $region6: #{convnext_with_cellcount_forward.1} parent=1 // loop_footer
      %s22 = sadd.s32 1, %s18
    $region7: #{convnext_with_cellcount_forward.1} parent=1 // loop_footer_branch
      %17 = sbr.rel target = $region3
    $region8: #{convnext_with_cellcount_forward.1} parent=1 // loop_exit
      _
    %2703 = vsyncpa [#allocation4], 1
    %s2704 = scalar_lea.sflag [#allocation4], 1
    %2705 = vsyncpa %s2704, 1

</llo_original>
